<compile_context>
chip_gen: v6e
topology: v6e:2x2x1
jax: 0.10.0
libtpu: 0.0.40
codegen_flags: <defaults>
</compile_context>

<pallas_src>
import functools

import numpy as np
import jax
import jax.numpy as jnp
from jax import lax
from jax.experimental import pallas as pl
from jax.experimental.pallas import tpu as pltpu

RATIO = 0.8  # TopKPooling ratio


def _spec2d(shape):
    # full-array block (always legal regardless of (8,128) divisibility)
    return pl.BlockSpec(shape, lambda i: (0, 0))


# ----------------------------------------------------------------------------
# Kernel A: edge decoder + GINEConv + outer ReLU + TopK score (fused)
# ----------------------------------------------------------------------------
def _encoder_kernel(ea_ref, dw1_ref, db1_ref, dw2_ref, db2_ref,
                    dst_ref, xj_ref, x_ref,
                    gw1_ref, gb1_ref, gw2_ref, gb2_ref, wn_ref,
                    h_ref, s_ref):
    # edge decoder: relu(dec1), relu(dec2)
    e = jnp.maximum(
        jnp.dot(ea_ref[...], dw1_ref[...], preferred_element_type=jnp.float32)
        + db1_ref[...], 0.0)
    e = jnp.maximum(
        jnp.dot(e, dw2_ref[...], preferred_element_type=jnp.float32)
        + db2_ref[...], 0.0)

    # GINE message: relu(x_src + edge_attr)
    msg = jnp.maximum(xj_ref[...] + e, 0.0)                       # [E, 32]

    # Aggregation: adjacency mask built in vregs (never materialized in HBM)
    n_nodes = x_ref.shape[0]
    n_edges = xj_ref.shape[0]
    row_ids = lax.broadcasted_iota(jnp.int32, (n_nodes, n_edges), 0)
    adj = (row_ids == dst_ref[...]).astype(jnp.float32)           # [N, E]
    z = x_ref[...] + jnp.dot(adj, msg, preferred_element_type=jnp.float32)

    # GINE mlp (32->128 relu, 128->512) + outer F.relu
    h = jnp.maximum(
        jnp.dot(z, gw1_ref[...], preferred_element_type=jnp.float32)
        + gb1_ref[...], 0.0)
    h = jnp.maximum(
        jnp.dot(h, gw2_ref[...], preferred_element_type=jnp.float32)
        + gb2_ref[...], 0.0)
    h_ref[...] = h

    # TopKPooling score: tanh(h . w / ||w||)  (w pre-normalised outside)
    s_ref[...] = jnp.tanh(
        jnp.dot(h, wn_ref[...], preferred_element_type=jnp.float32))


# ----------------------------------------------------------------------------
# Kernel B: masked per-graph max/mean readout + MLP head + log_softmax (fused)
# ----------------------------------------------------------------------------
def _readout_head_kernel(h_ref, s_ref, sel_ref, b_ref,
                         w1a_ref, w1b_ref, b1_ref,
                         w2_ref, b2_ref, w3_ref, b3_ref,
                         o_ref, *, num_graphs):
    sx = h_ref[...] * s_ref[...]                                  # x[perm]*score
    channels = sx.shape[1]
    gcol = lax.broadcasted_iota(jnp.int32, (num_graphs, 1), 0)     # [G,1]

    pmax = jnp.zeros((num_graphs, channels), jnp.float32)
    pmean = jnp.zeros((num_graphs, channels), jnp.float32)
    # G is tiny here; for large G this loop becomes a "parallel" grid axis.
    for g in range(num_graphs):
        m = sel_ref[...] * (b_ref[...] == g).astype(jnp.float32)   # [N,1] keep-mask
        cnt = jnp.sum(m)
        gate = (cnt > 0.0).astype(jnp.float32)                     # empty-graph guard
        mx = jnp.max(jnp.where(m > 0.0, sx, -3.0e38), axis=0, keepdims=True) * gate
        mean = jnp.sum(sx * m, axis=0, keepdims=True) / jnp.maximum(cnt, 1.0)
        onehot = (gcol == g).astype(jnp.float32)                   # [G,1]
        pmax = pmax + onehot * mx
        pmean = pmean + onehot * mean

    # cat([gmp, gap]) @ W1  ==  gmp @ W1a + gap @ W1b
    z = jnp.maximum(
        jnp.dot(pmax, w1a_ref[...], preferred_element_type=jnp.float32)
        + jnp.dot(pmean, w1b_ref[...], preferred_element_type=jnp.float32)
        + b1_ref[...], 0.0)
    # TODO(synk): F.dropout(p=0.4) is identity here (eval mode, training=False)
    z = jnp.maximum(
        jnp.dot(z, w2_ref[...], preferred_element_type=jnp.float32)
        + b2_ref[...], 0.0)
    y = jnp.dot(z, w3_ref[...], preferred_element_type=jnp.float32) + b3_ref[...]
    y = y - jnp.max(y, axis=-1, keepdims=True)
    o_ref[...] = y - jnp.log(jnp.sum(jnp.exp(y), axis=-1, keepdims=True))


# ----------------------------------------------------------------------------
# device-side glue: per-graph top-ceil(ratio*n_g) keep-mask (no host sync)
# ----------------------------------------------------------------------------
def _topk_select(score, batch, num_graphs, ratio):
    n = score.shape[0]
    gids = jnp.arange(num_graphs, dtype=jnp.int32)
    counts = jnp.sum((batch[None, :] == gids[:, None]).astype(jnp.int32), axis=1)
    k = jnp.ceil(ratio * counts.astype(jnp.float32)).astype(jnp.int32)       # [G]
    idx = jnp.arange(n, dtype=jnp.int32)
    beats = (score[None, :] > score[:, None]) | (
        (score[None, :] == score[:, None]) & (idx[None, :] < idx[:, None]))
    same = batch[None, :] == batch[:, None]
    rank = jnp.sum((beats & same).astype(jnp.int32), axis=1)                  # [N]
    # TODO(synk): ties break by node index; torch.topk may order exact ties differently.
    return (rank < jnp.take(k, batch)).astype(jnp.float32)


# ----------------------------------------------------------------------------
# full forward pass (jit-able)
# ----------------------------------------------------------------------------
@functools.partial(jax.jit, static_argnames=("num_graphs",))
def net_forward(params, x, edge_index, batch, edge_attr, *, num_graphs):
    n_nodes = x.shape[0]
    n_edges = edge_attr.shape[0]
    hidden = params["gine_w2"].shape[1]                     # 512
    n_cls = params["lin3_w"].shape[1]                       # 8

    src = edge_index[0].astype(jnp.int32)
    dst = edge_index[1].astype(jnp.int32)
    xj = jnp.take(x, src, axis=0)                           # [E, 32] gather (glue)
    dst_row = dst.reshape(1, n_edges)

    w = params["pool1_w"]
    wn = (w / jnp.sqrt(jnp.sum(w * w))).reshape(hidden, 1)

    h, score = pl.pallas_call(
        _encoder_kernel,
        out_shape=(jax.ShapeDtypeStruct((n_nodes, hidden), jnp.float32),
                   jax.ShapeDtypeStruct((n_nodes, 1), jnp.float32)),
        grid=(1,),
        in_specs=[
            _spec2d(edge_attr.shape),
            _spec2d(params["dec1_w"].shape), _spec2d(params["dec1_b"].shape),
            _spec2d(params["dec2_w"].shape), _spec2d(params["dec2_b"].shape),
            _spec2d(dst_row.shape),
            _spec2d(xj.shape),
            _spec2d(x.shape),
            _spec2d(params["gine_w1"].shape), _spec2d(params["gine_b1"].shape),
            _spec2d(params["gine_w2"].shape), _spec2d(params["gine_b2"].shape),
            _spec2d(wn.shape),
        ],
        out_specs=[_spec2d((n_nodes, hidden)), _spec2d((n_nodes, 1))],
        compiler_params=pltpu.CompilerParams(dimension_semantics=("arbitrary",)),
    )(edge_attr, params["dec1_w"], params["dec1_b"],
      params["dec2_w"], params["dec2_b"],
      dst_row, xj, x,
      params["gine_w1"], params["gine_b1"], params["gine_w2"], params["gine_b2"],
      wn)

    batch_i = batch.astype(jnp.int32)
    sel = _topk_select(score[:, 0], batch_i, num_graphs, RATIO)
    sel_col = sel.reshape(n_nodes, 1)
    batch_col = batch_i.reshape(n_nodes, 1)

    w1a = params["lin1_w"][:hidden, :]
    w1b = params["lin1_w"][hidden:, :]

    out = pl.pallas_call(
        functools.partial(_readout_head_kernel, num_graphs=num_graphs),
        out_shape=jax.ShapeDtypeStruct((num_graphs, n_cls), jnp.float32),
        grid=(1,),
        in_specs=[
            _spec2d((n_nodes, hidden)), _spec2d((n_nodes, 1)),
            _spec2d((n_nodes, 1)), _spec2d((n_nodes, 1)),
            _spec2d(w1a.shape), _spec2d(w1b.shape), _spec2d(params["lin1_b"].shape),
            _spec2d(params["lin2_w"].shape), _spec2d(params["lin2_b"].shape),
            _spec2d(params["lin3_w"].shape), _spec2d(params["lin3_b"].shape),
        ],
        out_specs=_spec2d((num_graphs, n_cls)),
        compiler_params=pltpu.CompilerParams(dimension_semantics=("arbitrary",)),
    )(h, score, sel_col, batch_col,
      w1a, w1b, params["lin1_b"],
      params["lin2_w"], params["lin2_b"],
      params["lin3_w"], params["lin3_b"])
    return out


# ----------------------------------------------------------------------------
# deterministic parameter init
# ----------------------------------------------------------------------------
def init_params(key):
    ks = jax.random.split(key, 20)

    def W(k, i, o):
        return jax.random.normal(k, (i, o), jnp.float32) / np.sqrt(i)

    def B(k, o):
        return jax.random.normal(k, (1, o), jnp.float32) * 0.01

    return {
        "dec1_w": W(ks[0], 100, 64), "dec1_b": B(ks[1], 64),
        "dec2_w": W(ks[2], 64, 32), "dec2_b": B(ks[3], 32),
        "gine_w1": W(ks[4], 32, 128), "gine_b1": B(ks[5], 128),
        "gine_w2": W(ks[6], 128, 512), "gine_b2": B(ks[7], 512),
        "pool1_w": jax.random.normal(ks[8], (512,), jnp.float32),
        "lin1_w": W(ks[9], 1024, 128), "lin1_b": B(ks[10], 128),
        "lin2_w": W(ks[11], 128, 64), "lin2_b": B(ks[12], 64),
        "lin3_w": W(ks[13], 64, 8), "lin3_b": B(ks[14], 8),
    }


# ----------------------------------------------------------------------------
# main
# ----------------------------------------------------------------------------
if __name__ == "__main__":
    root = jax.random.PRNGKey(0)
    k_x, k_ea, k_p = jax.random.split(root, 3)

    # two graphs of 6 nodes each; 12 directed edges per graph (ring + skip)
    nodes_per_graph, num_graphs = 6, 2
    N = nodes_per_graph * num_graphs
    src_list, dst_list = [], []
    for g in range(num_graphs):
        off = g * nodes_per_graph
        for i in range(nodes_per_graph):
            src_list += [off + i, off + i]
            dst_list += [off + (i + 1) % nodes_per_graph,
                         off + (i + 2) % nodes_per_graph]
    edge_index = jnp.asarray(np.stack([src_list, dst_list]), dtype=jnp.int32)
    E = edge_index.shape[1]                                   # 24

    x = jax.random.normal(k_x, (N, 32), jnp.float32)          # node features
    edge_attr = jax.random.normal(k_ea, (E, 100), jnp.float32)  # raw edge feats
    batch = jnp.asarray(np.repeat(np.arange(num_graphs), nodes_per_graph),
                        dtype=jnp.int32)

    params = init_params(k_p)

    out = net_forward(params, x, edge_index, batch, edge_attr,
                      num_graphs=num_graphs)
    out = jax.block_until_ready(out)

    assert out.shape == (num_graphs, 8), out.shape
    assert bool(jnp.all(jnp.isfinite(out)))
    probs = jnp.exp(out)
    assert bool(jnp.allclose(jnp.sum(probs, axis=-1), 1.0, atol=1e-3))

    print("KERNEL_OK")
</pallas_src>

<mosaic_0001>
module attributes {stable_mosaic.version = 11 : i64} {
  func.func @_encoder_kernel(%arg0: i32, %arg1: memref<24x100xf32, #tpu.memory_space<vmem>>, %arg2: memref<100x64xf32, #tpu.memory_space<vmem>>, %arg3: memref<1x64xf32, #tpu.memory_space<vmem>>, %arg4: memref<64x32xf32, #tpu.memory_space<vmem>>, %arg5: memref<1x32xf32, #tpu.memory_space<vmem>>, %arg6: memref<1x24xi32, #tpu.memory_space<vmem>>, %arg7: memref<24x32xf32, #tpu.memory_space<vmem>>, %arg8: memref<12x32xf32, #tpu.memory_space<vmem>>, %arg9: memref<32x128xf32, #tpu.memory_space<vmem>>, %arg10: memref<1x128xf32, #tpu.memory_space<vmem>>, %arg11: memref<128x512xf32, #tpu.memory_space<vmem>>, %arg12: memref<1x512xf32, #tpu.memory_space<vmem>>, %arg13: memref<512x1xf32, #tpu.memory_space<vmem>>, %arg14: memref<12x512xf32, #tpu.memory_space<vmem>>, %arg15: memref<12x1xf32, #tpu.memory_space<vmem>>) attributes {dimension_semantics = [#tpu.dimension_semantics<arbitrary>], iteration_bounds = array<i64: 1>, scalar_prefetch = 0 : i64, scratch_operands = 0 : i64, tpu.core_type = #tpu.core_type<tc>, window_params = [{pipeline_mode = #tpu.pipeline_mode<synchronous>, transform_indices = @transform_0, window_bounds = array<i64: 24, 100>}, {pipeline_mode = #tpu.pipeline_mode<synchronous>, transform_indices = @transform_1, window_bounds = array<i64: 100, 64>}, {pipeline_mode = #tpu.pipeline_mode<synchronous>, transform_indices = @transform_2, window_bounds = array<i64: 1, 64>}, {pipeline_mode = #tpu.pipeline_mode<synchronous>, transform_indices = @transform_3, window_bounds = array<i64: 64, 32>}, {pipeline_mode = #tpu.pipeline_mode<synchronous>, transform_indices = @transform_4, window_bounds = array<i64: 1, 32>}, {pipeline_mode = #tpu.pipeline_mode<synchronous>, transform_indices = @transform_5, window_bounds = array<i64: 1, 24>}, {pipeline_mode = #tpu.pipeline_mode<synchronous>, transform_indices = @transform_6, window_bounds = array<i64: 24, 32>}, {pipeline_mode = #tpu.pipeline_mode<synchronous>, transform_indices = @transform_7, window_bounds = array<i64: 12, 32>}, {pipeline_mode = #tpu.pipeline_mode<synchronous>, transform_indices = @transform_8, window_bounds = array<i64: 32, 128>}, {pipeline_mode = #tpu.pipeline_mode<synchronous>, transform_indices = @transform_9, window_bounds = array<i64: 1, 128>}, {pipeline_mode = #tpu.pipeline_mode<synchronous>, transform_indices = @transform_10, window_bounds = array<i64: 128, 512>}, {pipeline_mode = #tpu.pipeline_mode<synchronous>, transform_indices = @transform_11, window_bounds = array<i64: 1, 512>}, {pipeline_mode = #tpu.pipeline_mode<synchronous>, transform_indices = @transform_12, window_bounds = array<i64: 512, 1>}, {pipeline_mode = #tpu.pipeline_mode<synchronous>, transform_indices = @transform_13, window_bounds = array<i64: 12, 512>}, {pipeline_mode = #tpu.pipeline_mode<synchronous>, transform_indices = @transform_14, window_bounds = array<i64: 12, 1>}]} {
    %c0 = arith.constant 0 : index
    %c0_0 = arith.constant 0 : index
    %0 = vector.load %arg1[%c0, %c0_0] : memref<24x100xf32, #tpu.memory_space<vmem>>, vector<24x100xf32>
    %c0_1 = arith.constant 0 : index
    %c0_2 = arith.constant 0 : index
    %1 = vector.load %arg2[%c0_1, %c0_2] : memref<100x64xf32, #tpu.memory_space<vmem>>, vector<100x64xf32>
    %cst = arith.constant dense<0.000000e+00> : vector<24x64xf32>
    %2 = tpu.matmul %0, %1, %cst {dimension_numbers = #tpu.dot_dimension_numbers<[1], [0], [0], [1], [0, 0, 1, 1], [], []>} : vector<24x100xf32>, vector<100x64xf32>, vector<24x64xf32> -> vector<24x64xf32>
    %c0_3 = arith.constant 0 : index
    %c0_4 = arith.constant 0 : index
    %3 = vector.load %arg3[%c0_3, %c0_4] : memref<1x64xf32, #tpu.memory_space<vmem>>, vector<1x64xf32>
    %4 = vector.broadcast %3 : vector<1x64xf32> to vector<24x64xf32>
    %5 = arith.addf %2, %4 : vector<24x64xf32>
    %cst_5 = arith.constant 0.000000e+00 : f32
    %6 = vector.broadcast %cst_5 : f32 to vector<24x64xf32>
    %7 = arith.maximumf %5, %6 : vector<24x64xf32>
    %c0_6 = arith.constant 0 : index
    %c0_7 = arith.constant 0 : index
    %8 = vector.load %arg4[%c0_6, %c0_7] : memref<64x32xf32, #tpu.memory_space<vmem>>, vector<64x32xf32>
    %cst_8 = arith.constant dense<0.000000e+00> : vector<24x32xf32>
    %9 = tpu.matmul %7, %8, %cst_8 {dimension_numbers = #tpu.dot_dimension_numbers<[1], [0], [0], [1], [0, 0, 1, 1], [], []>} : vector<24x64xf32>, vector<64x32xf32>, vector<24x32xf32> -> vector<24x32xf32>
    %c0_9 = arith.constant 0 : index
    %c0_10 = arith.constant 0 : index
    %10 = vector.load %arg5[%c0_9, %c0_10] : memref<1x32xf32, #tpu.memory_space<vmem>>, vector<1x32xf32>
    %11 = vector.broadcast %10 : vector<1x32xf32> to vector<24x32xf32>
    %12 = arith.addf %9, %11 : vector<24x32xf32>
    %cst_11 = arith.constant 0.000000e+00 : f32
    %13 = vector.broadcast %cst_11 : f32 to vector<24x32xf32>
    %14 = arith.maximumf %12, %13 : vector<24x32xf32>
    %c0_12 = arith.constant 0 : index
    %c0_13 = arith.constant 0 : index
    %15 = vector.load %arg7[%c0_12, %c0_13] : memref<24x32xf32, #tpu.memory_space<vmem>>, vector<24x32xf32>
    %16 = arith.addf %15, %14 : vector<24x32xf32>
    %cst_14 = arith.constant 0.000000e+00 : f32
    %17 = vector.broadcast %cst_14 : f32 to vector<24x32xf32>
    %18 = arith.maximumf %16, %17 : vector<24x32xf32>
    %19 = tpu.iota {dimensions = array<i32: 0>} : vector<12x24xi32>
    %c0_15 = arith.constant 0 : index
    %c0_16 = arith.constant 0 : index
    %20 = vector.load %arg6[%c0_15, %c0_16] : memref<1x24xi32, #tpu.memory_space<vmem>>, vector<1x24xi32>
    %21 = vector.broadcast %20 : vector<1x24xi32> to vector<12x24xi32>
    %22 = arith.cmpi eq, %19, %21 : vector<12x24xi32>
    %23 = arith.extui %22 : vector<12x24xi1> to vector<12x24xi32>
    %24 = arith.sitofp %23 : vector<12x24xi32> to vector<12x24xf32>
    %c0_17 = arith.constant 0 : index
    %c0_18 = arith.constant 0 : index
    %25 = vector.load %arg8[%c0_17, %c0_18] : memref<12x32xf32, #tpu.memory_space<vmem>>, vector<12x32xf32>
    %cst_19 = arith.constant dense<0.000000e+00> : vector<12x32xf32>
    %26 = tpu.matmul %24, %18, %cst_19 {dimension_numbers = #tpu.dot_dimension_numbers<[1], [0], [0], [1], [0, 0, 1, 1], [], []>} : vector<12x24xf32>, vector<24x32xf32>, vector<12x32xf32> -> vector<12x32xf32>
    %27 = arith.addf %25, %26 : vector<12x32xf32>
    %c0_20 = arith.constant 0 : index
    %c0_21 = arith.constant 0 : index
    %28 = vector.load %arg9[%c0_20, %c0_21] : memref<32x128xf32, #tpu.memory_space<vmem>>, vector<32x128xf32>
    %cst_22 = arith.constant dense<0.000000e+00> : vector<12x128xf32>
    %29 = tpu.matmul %27, %28, %cst_22 {dimension_numbers = #tpu.dot_dimension_numbers<[1], [0], [0], [1], [0, 0, 1, 1], [], []>} : vector<12x32xf32>, vector<32x128xf32>, vector<12x128xf32> -> vector<12x128xf32>
    %c0_23 = arith.constant 0 : index
    %c0_24 = arith.constant 0 : index
    %30 = vector.load %arg10[%c0_23, %c0_24] : memref<1x128xf32, #tpu.memory_space<vmem>>, vector<1x128xf32>
    %31 = vector.broadcast %30 : vector<1x128xf32> to vector<12x128xf32>
    %32 = arith.addf %29, %31 : vector<12x128xf32>
    %cst_25 = arith.constant 0.000000e+00 : f32
    %33 = vector.broadcast %cst_25 : f32 to vector<12x128xf32>
    %34 = arith.maximumf %32, %33 : vector<12x128xf32>
    %c0_26 = arith.constant 0 : index
    %c0_27 = arith.constant 0 : index
    %35 = vector.load %arg11[%c0_26, %c0_27] : memref<128x512xf32, #tpu.memory_space<vmem>>, vector<128x512xf32>
    %cst_28 = arith.constant dense<0.000000e+00> : vector<12x512xf32>
    %36 = tpu.matmul %34, %35, %cst_28 {dimension_numbers = #tpu.dot_dimension_numbers<[1], [0], [0], [1], [0, 0, 1, 1], [], []>} : vector<12x128xf32>, vector<128x512xf32>, vector<12x512xf32> -> vector<12x512xf32>
    %c0_29 = arith.constant 0 : index
    %c0_30 = arith.constant 0 : index
    %37 = vector.load %arg12[%c0_29, %c0_30] : memref<1x512xf32, #tpu.memory_space<vmem>>, vector<1x512xf32>
    %38 = vector.broadcast %37 : vector<1x512xf32> to vector<12x512xf32>
    %39 = arith.addf %36, %38 : vector<12x512xf32>
    %cst_31 = arith.constant 0.000000e+00 : f32
    %40 = vector.broadcast %cst_31 : f32 to vector<12x512xf32>
    %41 = arith.maximumf %39, %40 : vector<12x512xf32>
    %c0_32 = arith.constant 0 : index
    %c0_33 = arith.constant 0 : index
    %42 = vector.load %arg14[%c0_32, %c0_33] : memref<12x512xf32, #tpu.memory_space<vmem>>, vector<12x512xf32>
    tpu.vector_store %arg14[%c0_32, %c0_33], %41 {strides = array<i32>} : memref<12x512xf32, #tpu.memory_space<vmem>>, vector<12x512xf32>,
    %c0_34 = arith.constant 0 : index
    %c0_35 = arith.constant 0 : index
    %43 = vector.load %arg13[%c0_34, %c0_35] : memref<512x1xf32, #tpu.memory_space<vmem>>, vector<512x1xf32>
    %cst_36 = arith.constant dense<0.000000e+00> : vector<12x1xf32>
    %44 = tpu.matmul %41, %43, %cst_36 {dimension_numbers = #tpu.dot_dimension_numbers<[1], [0], [0], [1], [0, 0, 1, 1], [], []>} : vector<12x512xf32>, vector<512x1xf32>, vector<12x1xf32> -> vector<12x1xf32>
    %45 = math.tanh %44 : vector<12x1xf32>
    %c0_37 = arith.constant 0 : index
    %c0_38 = arith.constant 0 : index
    %46 = vector.load %arg15[%c0_37, %c0_38] : memref<12x1xf32, #tpu.memory_space<vmem>>, vector<12x1xf32>
    tpu.vector_store %arg15[%c0_37, %c0_38], %45 {strides = array<i32>} : memref<12x1xf32, #tpu.memory_space<vmem>>, vector<12x1xf32>,
    return
  }
  func.func @transform_0(%arg0: i32) -> (i32, i32) {
    %c0_i32 = arith.constant 0 : i32
    %c0_i32_0 = arith.constant 0 : i32
    %c0_i32_1 = arith.constant 0 : i32
    return %c0_i32, %c0_i32_0 : i32, i32
  }
  func.func @transform_1(%arg0: i32) -> (i32, i32) {
    %c0_i32 = arith.constant 0 : i32
    %c0_i32_0 = arith.constant 0 : i32
    %c0_i32_1 = arith.constant 0 : i32
    return %c0_i32, %c0_i32_0 : i32, i32
  }
  func.func @transform_2(%arg0: i32) -> (i32, i32) {
    %c0_i32 = arith.constant 0 : i32
    %c0_i32_0 = arith.constant 0 : i32
    %c0_i32_1 = arith.constant 0 : i32
    return %c0_i32, %c0_i32_0 : i32, i32
  }
  func.func @transform_3(%arg0: i32) -> (i32, i32) {
    %c0_i32 = arith.constant 0 : i32
    %c0_i32_0 = arith.constant 0 : i32
    %c0_i32_1 = arith.constant 0 : i32
    return %c0_i32, %c0_i32_0 : i32, i32
  }
  func.func @transform_4(%arg0: i32) -> (i32, i32) {
    %c0_i32 = arith.constant 0 : i32
    %c0_i32_0 = arith.constant 0 : i32
    %c0_i32_1 = arith.constant 0 : i32
    return %c0_i32, %c0_i32_0 : i32, i32
  }
  func.func @transform_5(%arg0: i32) -> (i32, i32) {
    %c0_i32 = arith.constant 0 : i32
    %c0_i32_0 = arith.constant 0 : i32
    %c0_i32_1 = arith.constant 0 : i32
    return %c0_i32, %c0_i32_0 : i32, i32
  }
  func.func @transform_6(%arg0: i32) -> (i32, i32) {
    %c0_i32 = arith.constant 0 : i32
    %c0_i32_0 = arith.constant 0 : i32
    %c0_i32_1 = arith.constant 0 : i32
    return %c0_i32, %c0_i32_0 : i32, i32
  }
  func.func @transform_7(%arg0: i32) -> (i32, i32) {
    %c0_i32 = arith.constant 0 : i32
    %c0_i32_0 = arith.constant 0 : i32
    %c0_i32_1 = arith.constant 0 : i32
    return %c0_i32, %c0_i32_0 : i32, i32
  }
  func.func @transform_8(%arg0: i32) -> (i32, i32) {
    %c0_i32 = arith.constant 0 : i32
    %c0_i32_0 = arith.constant 0 : i32
    %c0_i32_1 = arith.constant 0 : i32
    return %c0_i32, %c0_i32_0 : i32, i32
  }
  func.func @transform_9(%arg0: i32) -> (i32, i32) {
    %c0_i32 = arith.constant 0 : i32
    %c0_i32_0 = arith.constant 0 : i32
    %c0_i32_1 = arith.constant 0 : i32
    return %c0_i32, %c0_i32_0 : i32, i32
  }
  func.func @transform_10(%arg0: i32) -> (i32, i32) {
    %c0_i32 = arith.constant 0 : i32
    %c0_i32_0 = arith.constant 0 : i32
    %c0_i32_1 = arith.constant 0 : i32
    return %c0_i32, %c0_i32_0 : i32, i32
  }
  func.func @transform_11(%arg0: i32) -> (i32, i32) {
    %c0_i32 = arith.constant 0 : i32
    %c0_i32_0 = arith.constant 0 : i32
    %c0_i32_1 = arith.constant 0 : i32
    return %c0_i32, %c0_i32_0 : i32, i32
  }
  func.func @transform_12(%arg0: i32) -> (i32, i32) {
    %c0_i32 = arith.constant 0 : i32
    %c0_i32_0 = arith.constant 0 : i32
    %c0_i32_1 = arith.constant 0 : i32
    return %c0_i32, %c0_i32_0 : i32, i32
  }
  func.func @transform_13(%arg0: i32) -> (i32, i32) {
    %c0_i32 = arith.constant 0 : i32
    %c0_i32_0 = arith.constant 0 : i32
    %c0_i32_1 = arith.constant 0 : i32
    return %c0_i32, %c0_i32_0 : i32, i32
  }
  func.func @transform_14(%arg0: i32) -> (i32, i32) {
    %c0_i32 = arith.constant 0 : i32
    %c0_i32_0 = arith.constant 0 : i32
    %c0_i32_1 = arith.constant 0 : i32
    return %c0_i32, %c0_i32_0 : i32, i32
  }
}

module attributes {stable_mosaic.version = 11 : i64} {
  func.func @_readout_head_kernel(%arg0: i32, %arg1: memref<12x512xf32, #tpu.memory_space<vmem>>, %arg2: memref<12x1xf32, #tpu.memory_space<vmem>>, %arg3: memref<12x1xf32, #tpu.memory_space<vmem>>, %arg4: memref<12x1xi32, #tpu.memory_space<vmem>>, %arg5: memref<512x128xf32, #tpu.memory_space<vmem>>, %arg6: memref<512x128xf32, #tpu.memory_space<vmem>>, %arg7: memref<1x128xf32, #tpu.memory_space<vmem>>, %arg8: memref<128x64xf32, #tpu.memory_space<vmem>>, %arg9: memref<1x64xf32, #tpu.memory_space<vmem>>, %arg10: memref<64x8xf32, #tpu.memory_space<vmem>>, %arg11: memref<1x8xf32, #tpu.memory_space<vmem>>, %arg12: memref<2x8xf32, #tpu.memory_space<vmem>>) attributes {dimension_semantics = [#tpu.dimension_semantics<arbitrary>], iteration_bounds = array<i64: 1>, scalar_prefetch = 0 : i64, scratch_operands = 0 : i64, tpu.core_type = #tpu.core_type<tc>, window_params = [{pipeline_mode = #tpu.pipeline_mode<synchronous>, transform_indices = @transform_0, window_bounds = array<i64: 12, 512>}, {pipeline_mode = #tpu.pipeline_mode<synchronous>, transform_indices = @transform_1, window_bounds = array<i64: 12, 1>}, {pipeline_mode = #tpu.pipeline_mode<synchronous>, transform_indices = @transform_2, window_bounds = array<i64: 12, 1>}, {pipeline_mode = #tpu.pipeline_mode<synchronous>, transform_indices = @transform_3, window_bounds = array<i64: 12, 1>}, {pipeline_mode = #tpu.pipeline_mode<synchronous>, transform_indices = @transform_4, window_bounds = array<i64: 512, 128>}, {pipeline_mode = #tpu.pipeline_mode<synchronous>, transform_indices = @transform_5, window_bounds = array<i64: 512, 128>}, {pipeline_mode = #tpu.pipeline_mode<synchronous>, transform_indices = @transform_6, window_bounds = array<i64: 1, 128>}, {pipeline_mode = #tpu.pipeline_mode<synchronous>, transform_indices = @transform_7, window_bounds = array<i64: 128, 64>}, {pipeline_mode = #tpu.pipeline_mode<synchronous>, transform_indices = @transform_8, window_bounds = array<i64: 1, 64>}, {pipeline_mode = #tpu.pipeline_mode<synchronous>, transform_indices = @transform_9, window_bounds = array<i64: 64, 8>}, {pipeline_mode = #tpu.pipeline_mode<synchronous>, transform_indices = @transform_10, window_bounds = array<i64: 1, 8>}, {pipeline_mode = #tpu.pipeline_mode<synchronous>, transform_indices = @transform_11, window_bounds = array<i64: 2, 8>}]} {
    %c0 = arith.constant 0 : index
    %c0_0 = arith.constant 0 : index
    %0 = vector.load %arg1[%c0, %c0_0] : memref<12x512xf32, #tpu.memory_space<vmem>>, vector<12x512xf32>
    %c0_1 = arith.constant 0 : index
    %c0_2 = arith.constant 0 : index
    %1 = vector.load %arg2[%c0_1, %c0_2] : memref<12x1xf32, #tpu.memory_space<vmem>>, vector<12x1xf32>
    %2 = vector.broadcast %1 : vector<12x1xf32> to vector<12x512xf32>
    %3 = arith.mulf %0, %2 : vector<12x512xf32>
    %4 = tpu.iota {dimensions = array<i32: 0>} : vector<2x1xi32>
    %cst = arith.constant 0.000000e+00 : f32
    %5 = vector.broadcast %cst : f32 to vector<2x512xf32>
    %cst_3 = arith.constant 0.000000e+00 : f32
    %6 = vector.broadcast %cst_3 : f32 to vector<2x512xf32>
    %c0_4 = arith.constant 0 : index
    %c0_5 = arith.constant 0 : index
    %7 = vector.load %arg3[%c0_4, %c0_5] : memref<12x1xf32, #tpu.memory_space<vmem>>, vector<12x1xf32>
    %c0_6 = arith.constant 0 : index
    %c0_7 = arith.constant 0 : index
    %8 = vector.load %arg4[%c0_6, %c0_7] : memref<12x1xi32, #tpu.memory_space<vmem>>, vector<12x1xi32>
    %c0_i32 = arith.constant 0 : i32
    %9 = vector.broadcast %c0_i32 : i32 to vector<12x1xi32>
    %10 = arith.cmpi eq, %8, %9 : vector<12x1xi32>
    %11 = arith.extui %10 : vector<12x1xi1> to vector<12x1xi32>
    %12 = arith.sitofp %11 : vector<12x1xi32> to vector<12x1xf32>
    %13 = arith.mulf %7, %12 : vector<12x1xf32>
    %14 = vector.shape_cast %13 : vector<12x1xf32> to vector<1x12x1xf32>
    %cst_8 = arith.constant dense<0.000000e+00> : vector<1xf32>
    %15 = vector.multi_reduction <add>, %14, %cst_8 [1, 2] : vector<1x12x1xf32> to vector<1xf32>
    %16 = vector.shape_cast %15 : vector<1xf32> to vector<1x1x1xf32>
    %17 = vector.extract %16[0, 0, 0] : f32 from vector<1x1x1xf32>
    %cst_9 = arith.constant 0.000000e+00 : f32
    %18 = arith.cmpf ogt, %17, %cst_9 : f32
    %19 = arith.extui %18 : i1 to i32
    %20 = arith.sitofp %19 : i32 to f32
    %cst_10 = arith.constant 0.000000e+00 : f32
    %21 = vector.broadcast %cst_10 : f32 to vector<12x1xf32>
    %22 = arith.cmpf ogt, %13, %21 : vector<12x1xf32>
    %cst_11 = arith.constant -3.000000e+38 : f32
    %23 = vector.shape_cast %22 : vector<12x1xi1> to vector<12x1xi1>
    %24 = vector.broadcast %23 : vector<12x1xi1> to vector<12x512xi1>
    %25 = vector.broadcast %cst_11 : f32 to vector<12x512xf32>
    %26 = arith.select %24, %3, %25 : vector<12x512xi1>, vector<12x512xf32>
    %cst_12 = arith.constant dense<0xFF800000> : vector<512xf32>
    %27 = vector.multi_reduction <maximumf>, %26, %cst_12 [0] : vector<12x512xf32> to vector<512xf32>
    %28 = vector.shape_cast %27 : vector<512xf32> to vector<1x512xf32>
    %29 = vector.broadcast %20 : f32 to vector<1x512xf32>
    %30 = arith.mulf %28, %29 : vector<1x512xf32>
    %31 = vector.broadcast %13 : vector<12x1xf32> to vector<12x512xf32>
    %32 = arith.mulf %3, %31 : vector<12x512xf32>
    %cst_13 = arith.constant dense<0.000000e+00> : vector<512xf32>
    %33 = vector.multi_reduction <add>, %32, %cst_13 [0] : vector<12x512xf32> to vector<512xf32>
    %34 = vector.shape_cast %33 : vector<512xf32> to vector<1x512xf32>
    %cst_14 = arith.constant 1.000000e+00 : f32
    %35 = arith.maximumf %17, %cst_14 : f32
    %36 = vector.broadcast %35 : f32 to vector<1x512xf32>
    %37 = arith.divf %34, %36 : vector<1x512xf32>
    %c0_i32_15 = arith.constant 0 : i32
    %38 = vector.broadcast %c0_i32_15 : i32 to vector<2x1xi32>
    %39 = arith.cmpi eq, %4, %38 : vector<2x1xi32>
    %40 = arith.extui %39 : vector<2x1xi1> to vector<2x1xi32>
    %41 = arith.sitofp %40 : vector<2x1xi32> to vector<2x1xf32>
    %42 = vector.broadcast %41 : vector<2x1xf32> to vector<2x512xf32>
    %43 = vector.broadcast %30 : vector<1x512xf32> to vector<2x512xf32>
    %44 = arith.mulf %42, %43 : vector<2x512xf32>
    %45 = arith.addf %5, %44 : vector<2x512xf32>
    %46 = vector.broadcast %41 : vector<2x1xf32> to vector<2x512xf32>
    %47 = vector.broadcast %37 : vector<1x512xf32> to vector<2x512xf32>
    %48 = arith.mulf %46, %47 : vector<2x512xf32>
    %49 = arith.addf %6, %48 : vector<2x512xf32>
    %c0_16 = arith.constant 0 : index
    %c0_17 = arith.constant 0 : index
    %50 = vector.load %arg3[%c0_16, %c0_17] : memref<12x1xf32, #tpu.memory_space<vmem>>, vector<12x1xf32>
    %c0_18 = arith.constant 0 : index
    %c0_19 = arith.constant 0 : index
    %51 = vector.load %arg4[%c0_18, %c0_19] : memref<12x1xi32, #tpu.memory_space<vmem>>, vector<12x1xi32>
    %c1_i32 = arith.constant 1 : i32
    %52 = vector.broadcast %c1_i32 : i32 to vector<12x1xi32>
    %53 = arith.cmpi eq, %51, %52 : vector<12x1xi32>
    %54 = arith.extui %53 : vector<12x1xi1> to vector<12x1xi32>
    %55 = arith.sitofp %54 : vector<12x1xi32> to vector<12x1xf32>
    %56 = arith.mulf %50, %55 : vector<12x1xf32>
    %57 = vector.shape_cast %56 : vector<12x1xf32> to vector<1x12x1xf32>
    %cst_20 = arith.constant dense<0.000000e+00> : vector<1xf32>
    %58 = vector.multi_reduction <add>, %57, %cst_20 [1, 2] : vector<1x12x1xf32> to vector<1xf32>
    %59 = vector.shape_cast %58 : vector<1xf32> to vector<1x1x1xf32>
    %60 = vector.extract %59[0, 0, 0] : f32 from vector<1x1x1xf32>
    %cst_21 = arith.constant 0.000000e+00 : f32
    %61 = arith.cmpf ogt, %60, %cst_21 : f32
    %62 = arith.extui %61 : i1 to i32
    %63 = arith.sitofp %62 : i32 to f32
    %cst_22 = arith.constant 0.000000e+00 : f32
    %64 = vector.broadcast %cst_22 : f32 to vector<12x1xf32>
    %65 = arith.cmpf ogt, %56, %64 : vector<12x1xf32>
    %cst_23 = arith.constant -3.000000e+38 : f32
    %66 = vector.shape_cast %65 : vector<12x1xi1> to vector<12x1xi1>
    %67 = vector.broadcast %66 : vector<12x1xi1> to vector<12x512xi1>
    %68 = vector.broadcast %cst_23 : f32 to vector<12x512xf32>
    %69 = arith.select %67, %3, %68 : vector<12x512xi1>, vector<12x512xf32>
    %cst_24 = arith.constant dense<0xFF800000> : vector<512xf32>
    %70 = vector.multi_reduction <maximumf>, %69, %cst_24 [0] : vector<12x512xf32> to vector<512xf32>
    %71 = vector.shape_cast %70 : vector<512xf32> to vector<1x512xf32>
    %72 = vector.broadcast %63 : f32 to vector<1x512xf32>
    %73 = arith.mulf %71, %72 : vector<1x512xf32>
    %74 = vector.broadcast %56 : vector<12x1xf32> to vector<12x512xf32>
    %75 = arith.mulf %3, %74 : vector<12x512xf32>
    %cst_25 = arith.constant dense<0.000000e+00> : vector<512xf32>
    %76 = vector.multi_reduction <add>, %75, %cst_25 [0] : vector<12x512xf32> to vector<512xf32>
    %77 = vector.shape_cast %76 : vector<512xf32> to vector<1x512xf32>
    %cst_26 = arith.constant 1.000000e+00 : f32
    %78 = arith.maximumf %60, %cst_26 : f32
    %79 = vector.broadcast %78 : f32 to vector<1x512xf32>
    %80 = arith.divf %77, %79 : vector<1x512xf32>
    %c1_i32_27 = arith.constant 1 : i32
    %81 = vector.broadcast %c1_i32_27 : i32 to vector<2x1xi32>
    %82 = arith.cmpi eq, %4, %81 : vector<2x1xi32>
    %83 = arith.extui %82 : vector<2x1xi1> to vector<2x1xi32>
    %84 = arith.sitofp %83 : vector<2x1xi32> to vector<2x1xf32>
    %85 = vector.broadcast %84 : vector<2x1xf32> to vector<2x512xf32>
    %86 = vector.broadcast %73 : vector<1x512xf32> to vector<2x512xf32>
    %87 = arith.mulf %85, %86 : vector<2x512xf32>
    %88 = arith.addf %45, %87 : vector<2x512xf32>
    %89 = vector.broadcast %84 : vector<2x1xf32> to vector<2x512xf32>
    %90 = vector.broadcast %80 : vector<1x512xf32> to vector<2x512xf32>
    %91 = arith.mulf %89, %90 : vector<2x512xf32>
    %92 = arith.addf %49, %91 : vector<2x512xf32>
    %c0_28 = arith.constant 0 : index
    %c0_29 = arith.constant 0 : index
    %93 = vector.load %arg5[%c0_28, %c0_29] : memref<512x128xf32, #tpu.memory_space<vmem>>, vector<512x128xf32>
    %cst_30 = arith.constant dense<0.000000e+00> : vector<2x128xf32>
    %94 = tpu.matmul %88, %93, %cst_30 {dimension_numbers = #tpu.dot_dimension_numbers<[1], [0], [0], [1], [0, 0, 1, 1], [], []>} : vector<2x512xf32>, vector<512x128xf32>, vector<2x128xf32> -> vector<2x128xf32>
    %c0_31 = arith.constant 0 : index
    %c0_32 = arith.constant 0 : index
    %95 = vector.load %arg6[%c0_31, %c0_32] : memref<512x128xf32, #tpu.memory_space<vmem>>, vector<512x128xf32>
    %cst_33 = arith.constant dense<0.000000e+00> : vector<2x128xf32>
    %96 = tpu.matmul %92, %95, %cst_33 {dimension_numbers = #tpu.dot_dimension_numbers<[1], [0], [0], [1], [0, 0, 1, 1], [], []>} : vector<2x512xf32>, vector<512x128xf32>, vector<2x128xf32> -> vector<2x128xf32>
    %97 = arith.addf %94, %96 : vector<2x128xf32>
    %c0_34 = arith.constant 0 : index
    %c0_35 = arith.constant 0 : index
    %98 = vector.load %arg7[%c0_34, %c0_35] : memref<1x128xf32, #tpu.memory_space<vmem>>, vector<1x128xf32>
    %99 = vector.broadcast %98 : vector<1x128xf32> to vector<2x128xf32>
    %100 = arith.addf %97, %99 : vector<2x128xf32>
    %cst_36 = arith.constant 0.000000e+00 : f32
    %101 = vector.broadcast %cst_36 : f32 to vector<2x128xf32>
    %102 = arith.maximumf %100, %101 : vector<2x128xf32>
    %c0_37 = arith.constant 0 : index
    %c0_38 = arith.constant 0 : index
    %103 = vector.load %arg8[%c0_37, %c0_38] : memref<128x64xf32, #tpu.memory_space<vmem>>, vector<128x64xf32>
    %cst_39 = arith.constant dense<0.000000e+00> : vector<2x64xf32>
    %104 = tpu.matmul %102, %103, %cst_39 {dimension_numbers = #tpu.dot_dimension_numbers<[1], [0], [0], [1], [0, 0, 1, 1], [], []>} : vector<2x128xf32>, vector<128x64xf32>, vector<2x64xf32> -> vector<2x64xf32>
    %c0_40 = arith.constant 0 : index
    %c0_41 = arith.constant 0 : index
    %105 = vector.load %arg9[%c0_40, %c0_41] : memref<1x64xf32, #tpu.memory_space<vmem>>, vector<1x64xf32>
    %106 = vector.broadcast %105 : vector<1x64xf32> to vector<2x64xf32>
    %107 = arith.addf %104, %106 : vector<2x64xf32>
    %cst_42 = arith.constant 0.000000e+00 : f32
    %108 = vector.broadcast %cst_42 : f32 to vector<2x64xf32>
    %109 = arith.maximumf %107, %108 : vector<2x64xf32>
    %c0_43 = arith.constant 0 : index
    %c0_44 = arith.constant 0 : index
    %110 = vector.load %arg10[%c0_43, %c0_44] : memref<64x8xf32, #tpu.memory_space<vmem>>, vector<64x8xf32>
    %cst_45 = arith.constant dense<0.000000e+00> : vector<2x8xf32>
    %111 = tpu.matmul %109, %110, %cst_45 {dimension_numbers = #tpu.dot_dimension_numbers<[1], [0], [0], [1], [0, 0, 1, 1], [], []>} : vector<2x64xf32>, vector<64x8xf32>, vector<2x8xf32> -> vector<2x8xf32>
    %c0_46 = arith.constant 0 : index
    %c0_47 = arith.constant 0 : index
    %112 = vector.load %arg11[%c0_46, %c0_47] : memref<1x8xf32, #tpu.memory_space<vmem>>, vector<1x8xf32>
    %113 = vector.broadcast %112 : vector<1x8xf32> to vector<2x8xf32>
    %114 = arith.addf %111, %113 : vector<2x8xf32>
    %cst_48 = arith.constant dense<0xFF800000> : vector<2xf32>
    %115 = vector.multi_reduction <maximumf>, %114, %cst_48 [1] : vector<2x8xf32> to vector<2xf32>
    %116 = vector.shape_cast %115 : vector<2xf32> to vector<2x1xf32>
    %117 = vector.broadcast %116 : vector<2x1xf32> to vector<2x8xf32>
    %118 = arith.subf %114, %117 : vector<2x8xf32>
    %119 = math.exp %118 : vector<2x8xf32>
    %cst_49 = arith.constant dense<0.000000e+00> : vector<2xf32>
    %120 = vector.multi_reduction <add>, %119, %cst_49 [1] : vector<2x8xf32> to vector<2xf32>
    %121 = vector.shape_cast %120 : vector<2xf32> to vector<2x1xf32>
    %122 = math.log %121 : vector<2x1xf32>
    %123 = vector.broadcast %122 : vector<2x1xf32> to vector<2x8xf32>
    %124 = arith.subf %118, %123 : vector<2x8xf32>
    %c0_50 = arith.constant 0 : index
    %c0_51 = arith.constant 0 : index
    %125 = vector.load %arg12[%c0_50, %c0_51] : memref<2x8xf32, #tpu.memory_space<vmem>>, vector<2x8xf32>
    tpu.vector_store %arg12[%c0_50, %c0_51], %124 {strides = array<i32>} : memref<2x8xf32, #tpu.memory_space<vmem>>, vector<2x8xf32>,
    return
  }
  func.func @transform_0(%arg0: i32) -> (i32, i32) {
    %c0_i32 = arith.constant 0 : i32
    %c0_i32_0 = arith.constant 0 : i32
    %c0_i32_1 = arith.constant 0 : i32
    return %c0_i32, %c0_i32_0 : i32, i32
  }
  func.func @transform_1(%arg0: i32) -> (i32, i32) {
    %c0_i32 = arith.constant 0 : i32
    %c0_i32_0 = arith.constant 0 : i32
    %c0_i32_1 = arith.constant 0 : i32
    return %c0_i32, %c0_i32_0 : i32, i32
  }
  func.func @transform_2(%arg0: i32) -> (i32, i32) {
    %c0_i32 = arith.constant 0 : i32
    %c0_i32_0 = arith.constant 0 : i32
    %c0_i32_1 = arith.constant 0 : i32
    return %c0_i32, %c0_i32_0 : i32, i32
  }
  func.func @transform_3(%arg0: i32) -> (i32, i32) {
    %c0_i32 = arith.constant 0 : i32
    %c0_i32_0 = arith.constant 0 : i32
    %c0_i32_1 = arith.constant 0 : i32
    return %c0_i32, %c0_i32_0 : i32, i32
  }
  func.func @transform_4(%arg0: i32) -> (i32, i32) {
    %c0_i32 = arith.constant 0 : i32
    %c0_i32_0 = arith.constant 0 : i32
    %c0_i32_1 = arith.constant 0 : i32
    return %c0_i32, %c0_i32_0 : i32, i32
  }
  func.func @transform_5(%arg0: i32) -> (i32, i32) {
    %c0_i32 = arith.constant 0 : i32
    %c0_i32_0 = arith.constant 0 : i32
    %c0_i32_1 = arith.constant 0 : i32
    return %c0_i32, %c0_i32_0 : i32, i32
  }
  func.func @transform_6(%arg0: i32) -> (i32, i32) {
    %c0_i32 = arith.constant 0 : i32
    %c0_i32_0 = arith.constant 0 : i32
    %c0_i32_1 = arith.constant 0 : i32
    return %c0_i32, %c0_i32_0 : i32, i32
  }
  func.func @transform_7(%arg0: i32) -> (i32, i32) {
    %c0_i32 = arith.constant 0 : i32
    %c0_i32_0 = arith.constant 0 : i32
    %c0_i32_1 = arith.constant 0 : i32
    return %c0_i32, %c0_i32_0 : i32, i32
  }
  func.func @transform_8(%arg0: i32) -> (i32, i32) {
    %c0_i32 = arith.constant 0 : i32
    %c0_i32_0 = arith.constant 0 : i32
    %c0_i32_1 = arith.constant 0 : i32
    return %c0_i32, %c0_i32_0 : i32, i32
  }
  func.func @transform_9(%arg0: i32) -> (i32, i32) {
    %c0_i32 = arith.constant 0 : i32
    %c0_i32_0 = arith.constant 0 : i32
    %c0_i32_1 = arith.constant 0 : i32
    return %c0_i32, %c0_i32_0 : i32, i32
  }
  func.func @transform_10(%arg0: i32) -> (i32, i32) {
    %c0_i32 = arith.constant 0 : i32
    %c0_i32_0 = arith.constant 0 : i32
    %c0_i32_1 = arith.constant 0 : i32
    return %c0_i32, %c0_i32_0 : i32, i32
  }
  func.func @transform_11(%arg0: i32) -> (i32, i32) {
    %c0_i32 = arith.constant 0 : i32
    %c0_i32_0 = arith.constant 0 : i32
    %c0_i32_1 = arith.constant 0 : i32
    return %c0_i32, %c0_i32_0 : i32, i32
  }
}

</mosaic_0001>

<llo_original>
// kernel: net_forward.3
$region0: #{net_forward.3}
  #allocation0 [shape = 'u32[]', space=smem, size = 0x4, offset = 0x4, fixed_abs, tag = 'smem constant byte address 0x4 - core index']
  #allocation1 [shape = 'u32[144,128]{1,0:T(1,128)}', space=vmem, size = 0x12000, scoped, tag = 'internal scratch']
  %s0 = inlined_call_operand.vmem [shape: f32[12,512], index: 0, kind: input, shape index: {}]
  %s1 = inlined_call_operand.vmem [shape: f32[12,1], index: 1, kind: input, shape index: {}]
  %s2 = inlined_call_operand.vmem [shape: f32[12,1], index: 2, kind: input, shape index: {}]
  %s3 = inlined_call_operand.vmem [shape: s32[12,1], index: 3, kind: input, shape index: {}]
  %s4 = inlined_call_operand.vmem [shape: f32[512,128], index: 4, kind: input, shape index: {}]
  %s5 = inlined_call_operand.vmem [shape: f32[512,128], index: 5, kind: input, shape index: {}]
  %s6 = inlined_call_operand.vmem [shape: f32[1,128], index: 6, kind: input, shape index: {}]
  %s7 = inlined_call_operand.vmem [shape: f32[128,64], index: 7, kind: input, shape index: {}]
  %s8 = inlined_call_operand.vmem [shape: f32[1,64], index: 8, kind: input, shape index: {}]
  %s9 = inlined_call_operand.vmem [shape: f32[64,8], index: 9, kind: input, shape index: {}]
  %s10 = inlined_call_operand.vmem [shape: f32[1,8], index: 10, kind: input, shape index: {}]
  %s11 = inlined_call_operand.hbm [shape: f32[2,8], index: 11, kind: output, shape index: {}]
  %s12 = sld [smem:[#allocation0]]
  $region54: #{net_forward.3} parent=0
    _
  %s14 = ssub.s32 1, %s12
  %s15 = scalar_select 0, %s14, %s12
  $region1: #{net_forward.3} parent=0
    #allocation2 [shape = 'u8[1024]{0}', space=vmem, size = 0x400, scoped, tag = 'output window, operand 0, single buffered']
    #allocation3 [shape = 's32[1]{0}', space=sflag, size = 0x4, scoped, tag = 'scoped memory for net_forward.3']
    %16 = vsyncpa [#allocation3], 0
    // Predicated region
    $region2: #{net_forward.3} parent=1 // pred_check
      _
    $region3: #{net_forward.3} parent=1 // pred_check_branch
      %18 = sbr.rel (0) target = $region5
    $region4: #{net_forward.3} parent=1 // pred_region
      _
    $region5: #{net_forward.3} parent=1 // pred_fallthru
      _
    // Predicated region
    $region6: #{net_forward.3} parent=1 // pred_check
      _
    $region7: #{net_forward.3} parent=1 // pred_check_branch
      %20 = sbr.rel (0) target = $region9
    $region8: #{net_forward.3} parent=1 // pred_region
      _
    $region9: #{net_forward.3} parent=1 // pred_fallthru
      _
    // Predicated region
    $region10: #{net_forward.3} parent=1 // pred_check
      _
    $region11: #{net_forward.3} parent=1 // pred_check_branch
      %22 = sbr.rel (0) target = $region13
    $region12: #{net_forward.3} parent=1 // pred_region
      _
    $region13: #{net_forward.3} parent=1 // pred_fallthru
      _
    // Predicated region
    $region14: #{net_forward.3} parent=1 // pred_check
      _
    $region15: #{net_forward.3} parent=1 // pred_check_branch
      %24 = sbr.rel (0) target = $region17
    $region16: #{net_forward.3} parent=1 // pred_region
      _
    $region17: #{net_forward.3} parent=1 // pred_fallthru
      _
    // Predicated region
    $region18: #{net_forward.3} parent=1 // pred_check
      _
    $region19: #{net_forward.3} parent=1 // pred_check_branch
      %26 = sbr.rel (0) target = $region21
    $region20: #{net_forward.3} parent=1 // pred_region
      _
    $region21: #{net_forward.3} parent=1 // pred_fallthru
      _
    // Predicated region
    $region22: #{net_forward.3} parent=1 // pred_check
      _
    $region23: #{net_forward.3} parent=1 // pred_check_branch
      %28 = sbr.rel (0) target = $region25
    $region24: #{net_forward.3} parent=1 // pred_region
      _
    $region25: #{net_forward.3} parent=1 // pred_fallthru
      _
    // Predicated region
    $region26: #{net_forward.3} parent=1 // pred_check
      _
    $region27: #{net_forward.3} parent=1 // pred_check_branch
      %30 = sbr.rel (0) target = $region29
    $region28: #{net_forward.3} parent=1 // pred_region
      _
    $region29: #{net_forward.3} parent=1 // pred_fallthru
      _
    // Predicated region
    $region30: #{net_forward.3} parent=1 // pred_check
      _
    $region31: #{net_forward.3} parent=1 // pred_check_branch
      %32 = sbr.rel (0) target = $region33
    $region32: #{net_forward.3} parent=1 // pred_region
      _
    $region33: #{net_forward.3} parent=1 // pred_fallthru
      _
    // Predicated region
    $region34: #{net_forward.3} parent=1 // pred_check
      _
    $region35: #{net_forward.3} parent=1 // pred_check_branch
      %34 = sbr.rel (0) target = $region37
    $region36: #{net_forward.3} parent=1 // pred_region
      _
    $region37: #{net_forward.3} parent=1 // pred_fallthru
      _
    // Predicated region
    $region38: #{net_forward.3} parent=1 // pred_check
      _
    $region39: #{net_forward.3} parent=1 // pred_check_branch
      %36 = sbr.rel (0) target = $region41
    $region40: #{net_forward.3} parent=1 // pred_region
      _
    $region41: #{net_forward.3} parent=1 // pred_fallthru
      _
    // Predicated region
    $region42: #{net_forward.3} parent=1 // pred_check
      _
    $region43: #{net_forward.3} parent=1 // pred_check_branch
      %38 = sbr.rel (0) target = $region45
    $region44: #{net_forward.3} parent=1 // pred_region
      _
    $region45: #{net_forward.3} parent=1 // pred_fallthru
      _
    %v39 = vld [vmem:[%s0] sm:$0xff]
    %v40 = vld [vmem:[%s0 + $0x8] sm:$0xff]
    %v41 = vld [vmem:[%s0 + $0x10] sm:$0xff]
    %v42 = vld [vmem:[%s0 + $0x18] sm:$0xff]
    %v43 = vld [vmem:[%s0 + $0x20] sm:$0xf]
    %v44 = vld [vmem:[%s0 + $0x28] sm:$0xf]
    %v45 = vld [vmem:[%s0 + $0x30] sm:$0xf]
    %v46 = vld [vmem:[%s0 + $0x38] sm:$0xf]
    %v47 = vld [vmem:[%s1] sm:$0xff]
    %v48 = vld [vmem:[%s1 + $0x8] sm:$0xf]
    %50 = vset.pattern.permute.xlu0 0
    %51 = vperm.xlu0 %50, %v47
    %v52 = vpop.permute.xlu0 %51
    %55 = vset.pattern.permute.xlu0 0
    %56 = vperm.xlu0 %55, %v48
    %v57 = vpop.permute.xlu0 %56
    %v59 = vmul.f32 %v39, %v52
    %v60 = vmul.f32 %v40, %v52
    %v61 = vmul.f32 %v41, %v52
    %v62 = vmul.f32 %v42, %v52
    %v63 = vmul.f32 %v43, %v57
    %v64 = vmul.f32 %v44, %v57
    %v65 = vmul.f32 %v45, %v57
    %v66 = vmul.f32 %v46, %v57
    %v67 = vlaneseq
    %v68 = vshrl.u32 %v67, 7
    %v69 = vld [vmem:[%s2] sm:$0xff]
    %v70 = vld [vmem:[%s2 + $0x8] sm:$0xf]
    %v71 = vld [vmem:[%s3] sm:$0xff]
    %v72 = vld [vmem:[%s3 + $0x8] sm:$0xf]
    %vm73 = vcmp.eq.s32.totalorder %v71, 0
    %vm74 = vcmp.eq.s32.totalorder %v72, 0
    %v75 = vsel %vm73, 1, 0
    %v76 = vsel %vm74, 1, 0
    %v77 = vcvt.s32.f32 %v75
    %v78 = vcvt.s32.f32 %v76
    %v79 = vmul.f32 %v69, %v77
    %v80 = vmul.f32 %v70, %v78
    %vm81 = vcmask 7168
    %v82 = vsel %vm81, %v79, 0.0
    %vm83 = vcmask 3072
    %v84 = vsel %vm83, %v80, 0.0
    %v85 = vadd.f32 %v82, %v84
    %86 = vadd.xlane.f32.xlu0 %v85
    %v87 = vpop.xlane.xlu0 %86
    %v88 = vrot.slane %v87, 4
    %v89 = vadd.f32 %v87, %v88
    %v90 = vrot.slane %v89, 2
    %v91 = vadd.f32 %v89, %v90
    %v92 = vrot.slane %v91, 1
    %v93 = vadd.f32 %v91, %v92
    %s94 = vtos %v93
    %p95 = scmp.gt.f32.partialorder %s94, 0.0
    %s96 = scalar_select %p95, 1, 0
    %s97 = scvt.s32.f32 %s96
    %vm98 = vcmp.gt.f32.partialorder %v79, 0.0
    %vm99 = vcmp.gt.f32.partialorder %v80, 0.0
    %v100 = vsel %vm98, 1, 0
    %v101 = vsel %vm99, 1, 0
    %102 = vset.pattern.permute.xlu0 0
    %103 = vperm.xlu0 %102, %v100
    %v104 = vpop.permute.xlu0 %103
    %105 = vset.pattern.permute.xlu0 0
    %106 = vperm.xlu0 %105, %v101
    %v107 = vpop.permute.xlu0 %106
    %vm108 = vcmp.eq.s32.totalorder %v104, 1
    %vm109 = vcmp.eq.s32.totalorder %v107, 1
    %v110 = vsel %vm108, %v59, -3e+38
    %v111 = vsel %vm108, %v60, -3e+38
    %v112 = vsel %vm108, %v61, -3e+38
    %v113 = vsel %vm108, %v62, -3e+38
    %v114 = vsel %vm109, %v63, -3e+38
    %v115 = vsel %vm109, %v64, -3e+38
    %v116 = vsel %vm109, %v65, -3e+38
    %v117 = vsel %vm109, %v66, -3e+38
    %vm118 = vcmask 1043456
    %v119 = vsel %vm118, %v114, -inf
    %v120 = vmax.f32 %v110, %v119
    %v121 = vrot.slane %v120, 4
    %v122 = vmax.f32 %v120, %v121
    %v123 = vrot.slane %v122, 2
    %v124 = vmax.f32 %v122, %v123
    %v125 = vrot.slane %v124, 1
    %v126 = vmax.f32 %v124, %v125
    %v127 = vsel %vm118, %v115, -inf
    %v128 = vmax.f32 %v111, %v127
    %v129 = vrot.slane %v128, 4
    %v130 = vmax.f32 %v128, %v129
    %v131 = vrot.slane %v130, 2
    %v132 = vmax.f32 %v130, %v131
    %v133 = vrot.slane %v132, 1
    %v134 = vmax.f32 %v132, %v133
    %v135 = vsel %vm118, %v116, -inf
    %v136 = vmax.f32 %v112, %v135
    %v137 = vrot.slane %v136, 4
    %v138 = vmax.f32 %v136, %v137
    %v139 = vrot.slane %v138, 2
    %v140 = vmax.f32 %v138, %v139
    %v141 = vrot.slane %v140, 1
    %v142 = vmax.f32 %v140, %v141
    %v143 = vsel %vm118, %v117, -inf
    %v144 = vmax.f32 %v113, %v143
    %v145 = vrot.slane %v144, 4
    %v146 = vmax.f32 %v144, %v145
    %v147 = vrot.slane %v146, 2
    %v148 = vmax.f32 %v146, %v147
    %v149 = vrot.slane %v148, 1
    %v150 = vmax.f32 %v148, %v149
    %v151 = vstv %s97
    %v152 = vmul.f32 %v126, %v151
    %v153 = vmul.f32 %v134, %v151
    %v154 = vmul.f32 %v142, %v151
    %v155 = vmul.f32 %v150, %v151
    %157 = vset.pattern.permute.xlu0 0
    %158 = vperm.xlu0 %157, %v79
    %v159 = vpop.permute.xlu0 %158
    %162 = vset.pattern.permute.xlu0 0
    %163 = vperm.xlu0 %162, %v80
    %v164 = vpop.permute.xlu0 %163
    %v166 = vmul.f32 %v59, %v159
    %v167 = vmul.f32 %v60, %v159
    %v168 = vmul.f32 %v61, %v159
    %v169 = vmul.f32 %v62, %v159
    %v170 = vmul.f32 %v63, %v164
    %v171 = vmul.f32 %v64, %v164
    %v172 = vmul.f32 %v65, %v164
    %v173 = vmul.f32 %v66, %v164
    %v174 = vsel %vm118, %v170, 0.0
    %v175 = vadd.f32 %v166, %v174
    %v176 = vrot.slane %v175, 4
    %v177 = vadd.f32 %v175, %v176
    %v178 = vrot.slane %v177, 2
    %v179 = vadd.f32 %v177, %v178
    %v180 = vrot.slane %v179, 1
    %v181 = vadd.f32 %v179, %v180
    %v182 = vsel %vm118, %v171, 0.0
    %v183 = vadd.f32 %v167, %v182
    %v184 = vrot.slane %v183, 4
    %v185 = vadd.f32 %v183, %v184
    %v186 = vrot.slane %v185, 2
    %v187 = vadd.f32 %v185, %v186
    %v188 = vrot.slane %v187, 1
    %v189 = vadd.f32 %v187, %v188
    %v190 = vsel %vm118, %v172, 0.0
    %v191 = vadd.f32 %v168, %v190
    %v192 = vrot.slane %v191, 4
    %v193 = vadd.f32 %v191, %v192
    %v194 = vrot.slane %v193, 2
    %v195 = vadd.f32 %v193, %v194
    %v196 = vrot.slane %v195, 1
    %v197 = vadd.f32 %v195, %v196
    %v198 = vsel %vm118, %v173, 0.0
    %v199 = vadd.f32 %v169, %v198
    %v200 = vrot.slane %v199, 4
    %v201 = vadd.f32 %v199, %v200
    %v202 = vrot.slane %v201, 2
    %v203 = vadd.f32 %v201, %v202
    %v204 = vrot.slane %v203, 1
    %v205 = vadd.f32 %v203, %v204
    %s206 = smax.f32 %s94, 1.0
    %v207 = vstv %s206
    %v208 = vrcp.pop %v207
    %v209 = vmul.f32 %v181, %v208
    %v210 = vmul.f32 %v189, %v208
    %v211 = vmul.f32 %v197, %v208
    %v212 = vmul.f32 %v205, %v208
    %vm213 = vcmp.eq.s32.totalorder %v68, 0
    %v214 = vsel %vm213, 1, 0
    %v215 = vcvt.s32.f32 %v214
    %v216 = vmul.f32 %v215, %v152
    %v217 = vmul.f32 %v215, %v153
    %v218 = vmul.f32 %v215, %v154
    %v219 = vmul.f32 %v215, %v155
    %v220 = vadd.f32 %v216, 0.0
    %v221 = vadd.f32 %v217, 0.0
    %v222 = vadd.f32 %v218, 0.0
    %v223 = vadd.f32 %v219, 0.0
    %v224 = vmul.f32 %v215, %v209
    %v225 = vmul.f32 %v215, %v210
    %v226 = vmul.f32 %v215, %v211
    %v227 = vmul.f32 %v215, %v212
    %v228 = vadd.f32 %v224, 0.0
    %v229 = vadd.f32 %v225, 0.0
    %v230 = vadd.f32 %v226, 0.0
    %v231 = vadd.f32 %v227, 0.0
    %vm232 = vcmp.eq.s32.totalorder %v71, 1
    %vm233 = vcmp.eq.s32.totalorder %v72, 1
    %v234 = vsel %vm232, 1, 0
    %v235 = vsel %vm233, 1, 0
    %v236 = vcvt.s32.f32 %v234
    %v237 = vcvt.s32.f32 %v235
    %v238 = vmul.f32 %v69, %v236
    %v239 = vmul.f32 %v70, %v237
    %v240 = vsel %vm81, %v238, 0.0
    %v241 = vsel %vm83, %v239, 0.0
    %v242 = vadd.f32 %v240, %v241
    %243 = vadd.xlane.f32.xlu0 %v242
    %v244 = vpop.xlane.xlu0 %243
    %v245 = vrot.slane %v244, 4
    %v246 = vadd.f32 %v244, %v245
    %v247 = vrot.slane %v246, 2
    %v248 = vadd.f32 %v246, %v247
    %v249 = vrot.slane %v248, 1
    %v250 = vadd.f32 %v248, %v249
    %s251 = vtos %v250
    %p252 = scmp.gt.f32.partialorder %s251, 0.0
    %s253 = scalar_select %p252, 1, 0
    %s254 = scvt.s32.f32 %s253
    %vm255 = vcmp.gt.f32.partialorder %v238, 0.0
    %vm256 = vcmp.gt.f32.partialorder %v239, 0.0
    %v257 = vsel %vm255, 1, 0
    %v258 = vsel %vm256, 1, 0
    %259 = vset.pattern.permute.xlu0 0
    %260 = vperm.xlu0 %259, %v257
    %v261 = vpop.permute.xlu0 %260
    %262 = vset.pattern.permute.xlu0 0
    %263 = vperm.xlu0 %262, %v258
    %v264 = vpop.permute.xlu0 %263
    %vm265 = vcmp.eq.s32.totalorder %v261, 1
    %vm266 = vcmp.eq.s32.totalorder %v264, 1
    %v267 = vsel %vm265, %v59, -3e+38
    %v268 = vsel %vm265, %v60, -3e+38
    %v269 = vsel %vm265, %v61, -3e+38
    %v270 = vsel %vm265, %v62, -3e+38
    %v271 = vsel %vm266, %v63, -3e+38
    %v272 = vsel %vm266, %v64, -3e+38
    %v273 = vsel %vm266, %v65, -3e+38
    %v274 = vsel %vm266, %v66, -3e+38
    %v275 = vsel %vm118, %v271, -inf
    %v276 = vmax.f32 %v267, %v275
    %v277 = vrot.slane %v276, 4
    %v278 = vmax.f32 %v276, %v277
    %v279 = vrot.slane %v278, 2
    %v280 = vmax.f32 %v278, %v279
    %v281 = vrot.slane %v280, 1
    %v282 = vmax.f32 %v280, %v281
    %v283 = vsel %vm118, %v272, -inf
    %v284 = vmax.f32 %v268, %v283
    %v285 = vrot.slane %v284, 4
    %v286 = vmax.f32 %v284, %v285
    %v287 = vrot.slane %v286, 2
    %v288 = vmax.f32 %v286, %v287
    %v289 = vrot.slane %v288, 1
    %v290 = vmax.f32 %v288, %v289
    %v291 = vsel %vm118, %v273, -inf
    %v292 = vmax.f32 %v269, %v291
    %v293 = vrot.slane %v292, 4
    %v294 = vmax.f32 %v292, %v293
    %v295 = vrot.slane %v294, 2
    %v296 = vmax.f32 %v294, %v295
    %v297 = vrot.slane %v296, 1
    %v298 = vmax.f32 %v296, %v297
    %v299 = vsel %vm118, %v274, -inf
    %v300 = vmax.f32 %v270, %v299
    %v301 = vrot.slane %v300, 4
    %v302 = vmax.f32 %v300, %v301
    %v303 = vrot.slane %v302, 2
    %v304 = vmax.f32 %v302, %v303
    %v305 = vrot.slane %v304, 1
    %v306 = vmax.f32 %v304, %v305
    %v307 = vstv %s254
    %v308 = vmul.f32 %v282, %v307
    %v309 = vmul.f32 %v290, %v307
    %v310 = vmul.f32 %v298, %v307
    %v311 = vmul.f32 %v306, %v307
    %313 = vset.pattern.permute.xlu0 0
    %314 = vperm.xlu0 %313, %v238
    %v315 = vpop.permute.xlu0 %314
    %318 = vset.pattern.permute.xlu0 0
    %319 = vperm.xlu0 %318, %v239
    %v320 = vpop.permute.xlu0 %319
    %v322 = vmul.f32 %v59, %v315
    %v323 = vmul.f32 %v60, %v315
    %v324 = vmul.f32 %v61, %v315
    %v325 = vmul.f32 %v62, %v315
    %v326 = vmul.f32 %v63, %v320
    %v327 = vmul.f32 %v64, %v320
    %v328 = vmul.f32 %v65, %v320
    %v329 = vmul.f32 %v66, %v320
    %v330 = vsel %vm118, %v326, 0.0
    %v331 = vadd.f32 %v322, %v330
    %v332 = vrot.slane %v331, 4
    %v333 = vadd.f32 %v331, %v332
    %v334 = vrot.slane %v333, 2
    %v335 = vadd.f32 %v333, %v334
    %v336 = vrot.slane %v335, 1
    %v337 = vadd.f32 %v335, %v336
    %v338 = vsel %vm118, %v327, 0.0
    %v339 = vadd.f32 %v323, %v338
    %v340 = vrot.slane %v339, 4
    %v341 = vadd.f32 %v339, %v340
    %v342 = vrot.slane %v341, 2
    %v343 = vadd.f32 %v341, %v342
    %v344 = vrot.slane %v343, 1
    %v345 = vadd.f32 %v343, %v344
    %v346 = vsel %vm118, %v328, 0.0
    %v347 = vadd.f32 %v324, %v346
    %v348 = vrot.slane %v347, 4
    %v349 = vadd.f32 %v347, %v348
    %v350 = vrot.slane %v349, 2
    %v351 = vadd.f32 %v349, %v350
    %v352 = vrot.slane %v351, 1
    %v353 = vadd.f32 %v351, %v352
    %v354 = vsel %vm118, %v329, 0.0
    %v355 = vadd.f32 %v325, %v354
    %v356 = vrot.slane %v355, 4
    %v357 = vadd.f32 %v355, %v356
    %v358 = vrot.slane %v357, 2
    %v359 = vadd.f32 %v357, %v358
    %v360 = vrot.slane %v359, 1
    %v361 = vadd.f32 %v359, %v360
    %s362 = smax.f32 %s251, 1.0
    %v363 = vstv %s362
    %v364 = vrcp.pop %v363
    %v365 = vmul.f32 %v337, %v364
    %v366 = vmul.f32 %v345, %v364
    %v367 = vmul.f32 %v353, %v364
    %v368 = vmul.f32 %v361, %v364
    %vm369 = vcmp.eq.s32.totalorder %v68, 1
    %v370 = vsel %vm369, 1, 0
    %v371 = vcvt.s32.f32 %v370
    %v372 = vmul.f32 %v371, %v308
    %v373 = vmul.f32 %v371, %v309
    %v374 = vmul.f32 %v371, %v310
    %v375 = vmul.f32 %v371, %v311
    %v376 = vadd.f32 %v220, %v372
    %v377 = vadd.f32 %v221, %v373
    %v378 = vadd.f32 %v222, %v374
    %v379 = vadd.f32 %v223, %v375
    %v380 = vmul.f32 %v371, %v365
    %v381 = vmul.f32 %v371, %v366
    %v382 = vmul.f32 %v371, %v367
    %v383 = vmul.f32 %v371, %v368
    %v384 = vadd.f32 %v228, %v380
    %v385 = vadd.f32 %v229, %v381
    %v386 = vadd.f32 %v230, %v382
    %v387 = vadd.f32 %v231, %v383
    %v388 = vld [vmem:[%s4] sm:$0xff]
    %v389 = vld [vmem:[%s4 + $0x8] sm:$0xff]
    %v390 = vld [vmem:[%s4 + $0x10] sm:$0xff]
    %v391 = vld [vmem:[%s4 + $0x18] sm:$0xff]
    %v392 = vld [vmem:[%s4 + $0x20] sm:$0xff]
    %v393 = vld [vmem:[%s4 + $0x28] sm:$0xff]
    %v394 = vld [vmem:[%s4 + $0x30] sm:$0xff]
    %v395 = vld [vmem:[%s4 + $0x38] sm:$0xff]
    %v396 = vld [vmem:[%s4 + $0x40] sm:$0xff]
    %v397 = vld [vmem:[%s4 + $0x48] sm:$0xff]
    %v398 = vld [vmem:[%s4 + $0x50] sm:$0xff]
    %v399 = vld [vmem:[%s4 + $0x58] sm:$0xff]
    %v400 = vld [vmem:[%s4 + $0x60] sm:$0xff]
    %v401 = vld [vmem:[%s4 + $0x68] sm:$0xff]
    %v402 = vld [vmem:[%s4 + $0x70] sm:$0xff]
    %v403 = vld [vmem:[%s4 + $0x78] sm:$0xff]
    %v404 = vld [vmem:[%s4 + $0x80] sm:$0xff]
    %v405 = vld [vmem:[%s4 + $0x88] sm:$0xff]
    %v406 = vld [vmem:[%s4 + $0x90] sm:$0xff]
    %v407 = vld [vmem:[%s4 + $0x98] sm:$0xff]
    %v408 = vld [vmem:[%s4 + $0xa0] sm:$0xff]
    %v409 = vld [vmem:[%s4 + $0xa8] sm:$0xff]
    %v410 = vld [vmem:[%s4 + $0xb0] sm:$0xff]
    %v411 = vld [vmem:[%s4 + $0xb8] sm:$0xff]
    %v412 = vld [vmem:[%s4 + $0xc0] sm:$0xff]
    %v413 = vld [vmem:[%s4 + $0xc8] sm:$0xff]
    %v414 = vld [vmem:[%s4 + $0xd0] sm:$0xff]
    %v415 = vld [vmem:[%s4 + $0xd8] sm:$0xff]
    %v416 = vld [vmem:[%s4 + $0xe0] sm:$0xff]
    %v417 = vld [vmem:[%s4 + $0xe8] sm:$0xff]
    %v418 = vld [vmem:[%s4 + $0xf0] sm:$0xff]
    %v419 = vld [vmem:[%s4 + $0xf8] sm:$0xff]
    %v420 = vld [vmem:[%s4 + $0x100] sm:$0xff]
    %v421 = vld [vmem:[%s4 + $0x108] sm:$0xff]
    %v422 = vld [vmem:[%s4 + $0x110] sm:$0xff]
    %v423 = vld [vmem:[%s4 + $0x118] sm:$0xff]
    %v424 = vld [vmem:[%s4 + $0x120] sm:$0xff]
    %v425 = vld [vmem:[%s4 + $0x128] sm:$0xff]
    %v426 = vld [vmem:[%s4 + $0x130] sm:$0xff]
    %v427 = vld [vmem:[%s4 + $0x138] sm:$0xff]
    %v428 = vld [vmem:[%s4 + $0x140] sm:$0xff]
    %v429 = vld [vmem:[%s4 + $0x148] sm:$0xff]
    %v430 = vld [vmem:[%s4 + $0x150] sm:$0xff]
    %v431 = vld [vmem:[%s4 + $0x158] sm:$0xff]
    %v432 = vld [vmem:[%s4 + $0x160] sm:$0xff]
    %v433 = vld [vmem:[%s4 + $0x168] sm:$0xff]
    %v434 = vld [vmem:[%s4 + $0x170] sm:$0xff]
    %v435 = vld [vmem:[%s4 + $0x178] sm:$0xff]
    %v436 = vld [vmem:[%s4 + $0x180] sm:$0xff]
    %v437 = vld [vmem:[%s4 + $0x188] sm:$0xff]
    %v438 = vld [vmem:[%s4 + $0x190] sm:$0xff]
    %v439 = vld [vmem:[%s4 + $0x198] sm:$0xff]
    %v440 = vld [vmem:[%s4 + $0x1a0] sm:$0xff]
    %v441 = vld [vmem:[%s4 + $0x1a8] sm:$0xff]
    %v442 = vld [vmem:[%s4 + $0x1b0] sm:$0xff]
    %v443 = vld [vmem:[%s4 + $0x1b8] sm:$0xff]
    %v444 = vld [vmem:[%s4 + $0x1c0] sm:$0xff]
    %v445 = vld [vmem:[%s4 + $0x1c8] sm:$0xff]
    %v446 = vld [vmem:[%s4 + $0x1d0] sm:$0xff]
    %v447 = vld [vmem:[%s4 + $0x1d8] sm:$0xff]
    %v448 = vld [vmem:[%s4 + $0x1e0] sm:$0xff]
    %v449 = vld [vmem:[%s4 + $0x1e8] sm:$0xff]
    %v450 = vld [vmem:[%s4 + $0x1f0] sm:$0xff]
    %v451 = vld [vmem:[%s4 + $0x1f8] sm:$0xff]
    %v452 = vld [vmem:[%s5] sm:$0xff]
    %v453 = vld [vmem:[%s5 + $0x8] sm:$0xff]
    %v454 = vld [vmem:[%s5 + $0x10] sm:$0xff]
    %v455 = vld [vmem:[%s5 + $0x18] sm:$0xff]
    %v456 = vld [vmem:[%s5 + $0x20] sm:$0xff]
    %v457 = vld [vmem:[%s5 + $0x28] sm:$0xff]
    %v458 = vld [vmem:[%s5 + $0x30] sm:$0xff]
    %v459 = vld [vmem:[%s5 + $0x38] sm:$0xff]
    %v460 = vld [vmem:[%s5 + $0x40] sm:$0xff]
    %v461 = vld [vmem:[%s5 + $0x48] sm:$0xff]
    %v462 = vld [vmem:[%s5 + $0x50] sm:$0xff]
    %v463 = vld [vmem:[%s5 + $0x58] sm:$0xff]
    %v464 = vld [vmem:[%s5 + $0x60] sm:$0xff]
    %v465 = vld [vmem:[%s5 + $0x68] sm:$0xff]
    %v466 = vld [vmem:[%s5 + $0x70] sm:$0xff]
    %v467 = vld [vmem:[%s5 + $0x78] sm:$0xff]
    %v468 = vld [vmem:[%s5 + $0x80] sm:$0xff]
    %v469 = vld [vmem:[%s5 + $0x88] sm:$0xff]
    %v470 = vld [vmem:[%s5 + $0x90] sm:$0xff]
    %v471 = vld [vmem:[%s5 + $0x98] sm:$0xff]
    %v472 = vld [vmem:[%s5 + $0xa0] sm:$0xff]
    %v473 = vld [vmem:[%s5 + $0xa8] sm:$0xff]
    %v474 = vld [vmem:[%s5 + $0xb0] sm:$0xff]
    %v475 = vld [vmem:[%s5 + $0xb8] sm:$0xff]
    %v476 = vld [vmem:[%s5 + $0xc0] sm:$0xff]
    %v477 = vld [vmem:[%s5 + $0xc8] sm:$0xff]
    %v478 = vld [vmem:[%s5 + $0xd0] sm:$0xff]
    %v479 = vld [vmem:[%s5 + $0xd8] sm:$0xff]
    %v480 = vld [vmem:[%s5 + $0xe0] sm:$0xff]
    %v481 = vld [vmem:[%s5 + $0xe8] sm:$0xff]
    %v482 = vld [vmem:[%s5 + $0xf0] sm:$0xff]
    %v483 = vld [vmem:[%s5 + $0xf8] sm:$0xff]
    %v484 = vld [vmem:[%s5 + $0x100] sm:$0xff]
    %v485 = vld [vmem:[%s5 + $0x108] sm:$0xff]
    %v486 = vld [vmem:[%s5 + $0x110] sm:$0xff]
    %v487 = vld [vmem:[%s5 + $0x118] sm:$0xff]
    %v488 = vld [vmem:[%s5 + $0x120] sm:$0xff]
    %v489 = vld [vmem:[%s5 + $0x128] sm:$0xff]
    %v490 = vld [vmem:[%s5 + $0x130] sm:$0xff]
    %v491 = vld [vmem:[%s5 + $0x138] sm:$0xff]
    %v492 = vld [vmem:[%s5 + $0x140] sm:$0xff]
    %v493 = vld [vmem:[%s5 + $0x148] sm:$0xff]
    %v494 = vld [vmem:[%s5 + $0x150] sm:$0xff]
    %v495 = vld [vmem:[%s5 + $0x158] sm:$0xff]
    %v496 = vld [vmem:[%s5 + $0x160] sm:$0xff]
    %v497 = vld [vmem:[%s5 + $0x168] sm:$0xff]
    %v498 = vld [vmem:[%s5 + $0x170] sm:$0xff]
    %v499 = vld [vmem:[%s5 + $0x178] sm:$0xff]
    %v500 = vld [vmem:[%s5 + $0x180] sm:$0xff]
    %v501 = vld [vmem:[%s5 + $0x188] sm:$0xff]
    %v502 = vld [vmem:[%s5 + $0x190] sm:$0xff]
    %v503 = vld [vmem:[%s5 + $0x198] sm:$0xff]
    %v504 = vld [vmem:[%s5 + $0x1a0] sm:$0xff]
    %v505 = vld [vmem:[%s5 + $0x1a8] sm:$0xff]
    %v506 = vld [vmem:[%s5 + $0x1b0] sm:$0xff]
    %v507 = vld [vmem:[%s5 + $0x1b8] sm:$0xff]
    %v508 = vld [vmem:[%s5 + $0x1c0] sm:$0xff]
    %v509 = vld [vmem:[%s5 + $0x1c8] sm:$0xff]
    %v510 = vld [vmem:[%s5 + $0x1d0] sm:$0xff]
    %v511 = vld [vmem:[%s5 + $0x1d8] sm:$0xff]
    %v512 = vld [vmem:[%s5 + $0x1e0] sm:$0xff]
    %v513 = vld [vmem:[%s5 + $0x1e8] sm:$0xff]
    %v514 = vld [vmem:[%s5 + $0x1f0] sm:$0xff]
    %v515 = vld [vmem:[%s5 + $0x1f8] sm:$0xff]
    %516 = vmatprep.subr.mxu0 0.0
    %517 = vmatpush1.msra.mxu0 %v467
    %518 = vmatprep.subr.mxu0 0.0
    %519 = vmatpush1.msra.mxu0 %v466
    %520 = vmatprep.subr.mxu0 0.0
    %521 = vmatpush1.msra.mxu0 %v465
    %522 = vmatprep.subr.mxu0 0.0
    %523 = vmatpush1.msra.mxu0 %v464
    %524 = vmatprep.subr.mxu0 0.0
    %525 = vmatpush1.msra.mxu0 %v463
    %526 = vmatprep.subr.mxu0 0.0
    %527 = vmatpush1.msra.mxu0 %v462
    %528 = vmatprep.subr.mxu0 0.0
    %529 = vmatpush1.msra.mxu0 %v461
    %530 = vmatprep.subr.mxu0 0.0
    %531 = vmatpush1.msra.mxu0 %v460
    %532 = vmatprep.subr.mxu0 0.0
    %533 = vmatpush1.msra.mxu0 %v459
    %534 = vmatprep.subr.mxu0 0.0
    %535 = vmatpush1.msra.mxu0 %v458
    %536 = vmatprep.subr.mxu0 0.0
    %537 = vmatpush1.msra.mxu0 %v457
    %538 = vmatprep.subr.mxu0 0.0
    %539 = vmatpush1.msra.mxu0 %v456
    %540 = vmatprep.subr.mxu0 0.0
    %541 = vmatpush1.msra.mxu0 %v455
    %542 = vmatprep.subr.mxu0 0.0
    %543 = vmatpush1.msra.mxu0 %v454
    %544 = vmatprep.subr.mxu0 0.0
    %545 = vmatpush1.msra.mxu0 %v453
    %546 = vmatprep.subr.mxu0 0.0
    %547 = vmatpush1.msra.mxu0 %v452
    %548 = vmatprep.subr.mxu0 0.0
    %549 = vmatpush2.msra.mxu0 %v483
    %550 = vmatprep.subr.mxu0 0.0
    %551 = vmatpush2.msra.mxu0 %v482
    %552 = vmatprep.subr.mxu0 0.0
    %553 = vmatpush2.msra.mxu0 %v481
    %554 = vmatprep.subr.mxu0 0.0
    %555 = vmatpush2.msra.mxu0 %v480
    %556 = vmatprep.subr.mxu0 0.0
    %557 = vmatpush2.msra.mxu0 %v479
    %558 = vmatprep.subr.mxu0 0.0
    %559 = vmatpush2.msra.mxu0 %v478
    %560 = vmatprep.subr.mxu0 0.0
    %561 = vmatpush2.msra.mxu0 %v477
    %562 = vmatprep.subr.mxu0 0.0
    %563 = vmatpush2.msra.mxu0 %v476
    %564 = vmatprep.subr.mxu0 0.0
    %565 = vmatpush2.msra.mxu0 %v475
    %566 = vmatprep.subr.mxu0 0.0
    %567 = vmatpush2.msra.mxu0 %v474
    %568 = vmatprep.subr.mxu0 0.0
    %569 = vmatpush2.msra.mxu0 %v473
    %570 = vmatprep.subr.mxu0 0.0
    %571 = vmatpush2.msra.mxu0 %v472
    %572 = vmatprep.subr.mxu0 0.0
    %573 = vmatpush2.msra.mxu0 %v471
    %574 = vmatprep.subr.mxu0 0.0
    %575 = vmatpush2.msra.mxu0 %v470
    %576 = vmatprep.subr.mxu0 0.0
    %577 = vmatpush2.msra.mxu0 %v469
    %578 = vmatprep.subr.mxu0 0.0
    %579 = vmatpush2.msra.mxu0 %v468
    %580 = vmatprep.mubr.f32.mxu0 %v385
    %581 = vmatmul.mubr.f32.gmra.mxu0 %v384
    %v582 = vpop.f32.mrf.mxu0
    %v583 = vadd.f32 0.0, %v582
    %v584 = vpop.f32.mrf.mxu0
    %585 = vdwg.mxu0
    %586 = vmatprep.subr.mxu0 0.0
    %587 = vmatpush1.msra.mxu0 %v499
    %588 = vmatprep.subr.mxu0 0.0
    %589 = vmatpush1.msra.mxu0 %v498
    %590 = vmatprep.subr.mxu0 0.0
    %591 = vmatpush1.msra.mxu0 %v497
    %592 = vmatprep.subr.mxu0 0.0
    %593 = vmatpush1.msra.mxu0 %v496
    %594 = vmatprep.subr.mxu0 0.0
    %595 = vmatpush1.msra.mxu0 %v495
    %596 = vmatprep.subr.mxu0 0.0
    %597 = vmatpush1.msra.mxu0 %v494
    %598 = vmatprep.subr.mxu0 0.0
    %599 = vmatpush1.msra.mxu0 %v493
    %600 = vmatprep.subr.mxu0 0.0
    %601 = vmatpush1.msra.mxu0 %v492
    %602 = vmatprep.subr.mxu0 0.0
    %603 = vmatpush1.msra.mxu0 %v491
    %604 = vmatprep.subr.mxu0 0.0
    %605 = vmatpush1.msra.mxu0 %v490
    %606 = vmatprep.subr.mxu0 0.0
    %607 = vmatpush1.msra.mxu0 %v489
    %608 = vmatprep.subr.mxu0 0.0
    %609 = vmatpush1.msra.mxu0 %v488
    %610 = vmatprep.subr.mxu0 0.0
    %611 = vmatpush1.msra.mxu0 %v487
    %612 = vmatprep.subr.mxu0 0.0
    %613 = vmatpush1.msra.mxu0 %v486
    %614 = vmatprep.subr.mxu0 0.0
    %615 = vmatpush1.msra.mxu0 %v485
    %616 = vmatprep.subr.mxu0 0.0
    %617 = vmatpush1.msra.mxu0 %v484
    %618 = vmatprep.subr.mxu0 0.0
    %619 = vmatpush2.msra.mxu0 %v515
    %620 = vmatprep.subr.mxu0 0.0
    %621 = vmatpush2.msra.mxu0 %v514
    %622 = vmatprep.subr.mxu0 0.0
    %623 = vmatpush2.msra.mxu0 %v513
    %624 = vmatprep.subr.mxu0 0.0
    %625 = vmatpush2.msra.mxu0 %v512
    %626 = vmatprep.subr.mxu0 0.0
    %627 = vmatpush2.msra.mxu0 %v511
    %628 = vmatprep.subr.mxu0 0.0
    %629 = vmatpush2.msra.mxu0 %v510
    %630 = vmatprep.subr.mxu0 0.0
    %631 = vmatpush2.msra.mxu0 %v509
    %632 = vmatprep.subr.mxu0 0.0
    %633 = vmatpush2.msra.mxu0 %v508
    %634 = vmatprep.subr.mxu0 0.0
    %635 = vmatpush2.msra.mxu0 %v507
    %636 = vmatprep.subr.mxu0 0.0
    %637 = vmatpush2.msra.mxu0 %v506
    %638 = vmatprep.subr.mxu0 0.0
    %639 = vmatpush2.msra.mxu0 %v505
    %640 = vmatprep.subr.mxu0 0.0
    %641 = vmatpush2.msra.mxu0 %v504
    %642 = vmatprep.subr.mxu0 0.0
    %643 = vmatpush2.msra.mxu0 %v503
    %644 = vmatprep.subr.mxu0 0.0
    %645 = vmatpush2.msra.mxu0 %v502
    %646 = vmatprep.subr.mxu0 0.0
    %647 = vmatpush2.msra.mxu0 %v501
    %648 = vmatprep.subr.mxu0 0.0
    %649 = vmatpush2.msra.mxu0 %v500
    %650 = vmatprep.mubr.f32.mxu0 %v387
    %651 = vmatmul.mubr.f32.gmra.mxu0 %v386
    %v652 = vpop.f32.mrf.mxu0
    %v653 = vadd.f32 %v583, %v652
    %v654 = vpop.f32.mrf.mxu0
    %655 = vdwg.mxu0
    %656 = vmatprep.subr.mxu0 0.0
    %657 = vmatpush1.msra.mxu0 %v403
    %658 = vmatprep.subr.mxu0 0.0
    %659 = vmatpush1.msra.mxu0 %v402
    %660 = vmatprep.subr.mxu0 0.0
    %661 = vmatpush1.msra.mxu0 %v401
    %662 = vmatprep.subr.mxu0 0.0
    %663 = vmatpush1.msra.mxu0 %v400
    %664 = vmatprep.subr.mxu0 0.0
    %665 = vmatpush1.msra.mxu0 %v399
    %666 = vmatprep.subr.mxu0 0.0
    %667 = vmatpush1.msra.mxu0 %v398
    %668 = vmatprep.subr.mxu0 0.0
    %669 = vmatpush1.msra.mxu0 %v397
    %670 = vmatprep.subr.mxu0 0.0
    %671 = vmatpush1.msra.mxu0 %v396
    %672 = vmatprep.subr.mxu0 0.0
    %673 = vmatpush1.msra.mxu0 %v395
    %674 = vmatprep.subr.mxu0 0.0
    %675 = vmatpush1.msra.mxu0 %v394
    %676 = vmatprep.subr.mxu0 0.0
    %677 = vmatpush1.msra.mxu0 %v393
    %678 = vmatprep.subr.mxu0 0.0
    %679 = vmatpush1.msra.mxu0 %v392
    %680 = vmatprep.subr.mxu0 0.0
    %681 = vmatpush1.msra.mxu0 %v391
    %682 = vmatprep.subr.mxu0 0.0
    %683 = vmatpush1.msra.mxu0 %v390
    %684 = vmatprep.subr.mxu0 0.0
    %685 = vmatpush1.msra.mxu0 %v389
    %686 = vmatprep.subr.mxu0 0.0
    %687 = vmatpush1.msra.mxu0 %v388
    %688 = vmatprep.subr.mxu0 0.0
    %689 = vmatpush2.msra.mxu0 %v419
    %690 = vmatprep.subr.mxu0 0.0
    %691 = vmatpush2.msra.mxu0 %v418
    %692 = vmatprep.subr.mxu0 0.0
    %693 = vmatpush2.msra.mxu0 %v417
    %694 = vmatprep.subr.mxu0 0.0
    %695 = vmatpush2.msra.mxu0 %v416
    %696 = vmatprep.subr.mxu0 0.0
    %697 = vmatpush2.msra.mxu0 %v415
    %698 = vmatprep.subr.mxu0 0.0
    %699 = vmatpush2.msra.mxu0 %v414
    %700 = vmatprep.subr.mxu0 0.0
    %701 = vmatpush2.msra.mxu0 %v413
    %702 = vmatprep.subr.mxu0 0.0
    %703 = vmatpush2.msra.mxu0 %v412
    %704 = vmatprep.subr.mxu0 0.0
    %705 = vmatpush2.msra.mxu0 %v411
    %706 = vmatprep.subr.mxu0 0.0
    %707 = vmatpush2.msra.mxu0 %v410
    %708 = vmatprep.subr.mxu0 0.0
    %709 = vmatpush2.msra.mxu0 %v409
    %710 = vmatprep.subr.mxu0 0.0
    %711 = vmatpush2.msra.mxu0 %v408
    %712 = vmatprep.subr.mxu0 0.0
    %713 = vmatpush2.msra.mxu0 %v407
    %714 = vmatprep.subr.mxu0 0.0
    %715 = vmatpush2.msra.mxu0 %v406
    %716 = vmatprep.subr.mxu0 0.0
    %717 = vmatpush2.msra.mxu0 %v405
    %718 = vmatprep.subr.mxu0 0.0
    %719 = vmatpush2.msra.mxu0 %v404
    %720 = vmatprep.mubr.f32.mxu0 %v377
    %721 = vmatmul.mubr.f32.gmra.mxu0 %v376
    %v722 = vpop.f32.mrf.mxu0
    %v723 = vadd.f32 %v653, %v722
    %v724 = vpop.f32.mrf.mxu0
    %725 = vdwg.mxu0
    %726 = vmatprep.subr.mxu0 0.0
    %727 = vmatpush1.msra.mxu0 %v435
    %728 = vmatprep.subr.mxu0 0.0
    %729 = vmatpush1.msra.mxu0 %v434
    %730 = vmatprep.subr.mxu0 0.0
    %731 = vmatpush1.msra.mxu0 %v433
    %732 = vmatprep.subr.mxu0 0.0
    %733 = vmatpush1.msra.mxu0 %v432
    %734 = vmatprep.subr.mxu0 0.0
    %735 = vmatpush1.msra.mxu0 %v431
    %736 = vmatprep.subr.mxu0 0.0
    %737 = vmatpush1.msra.mxu0 %v430
    %738 = vmatprep.subr.mxu0 0.0
    %739 = vmatpush1.msra.mxu0 %v429
    %740 = vmatprep.subr.mxu0 0.0
    %741 = vmatpush1.msra.mxu0 %v428
    %742 = vmatprep.subr.mxu0 0.0
    %743 = vmatpush1.msra.mxu0 %v427
    %744 = vmatprep.subr.mxu0 0.0
    %745 = vmatpush1.msra.mxu0 %v426
    %746 = vmatprep.subr.mxu0 0.0
    %747 = vmatpush1.msra.mxu0 %v425
    %748 = vmatprep.subr.mxu0 0.0
    %749 = vmatpush1.msra.mxu0 %v424
    %750 = vmatprep.subr.mxu0 0.0
    %751 = vmatpush1.msra.mxu0 %v423
    %752 = vmatprep.subr.mxu0 0.0
    %753 = vmatpush1.msra.mxu0 %v422
    %754 = vmatprep.subr.mxu0 0.0
    %755 = vmatpush1.msra.mxu0 %v421
    %756 = vmatprep.subr.mxu0 0.0
    %757 = vmatpush1.msra.mxu0 %v420
    %758 = vmatprep.subr.mxu0 0.0
    %759 = vmatpush2.msra.mxu0 %v451
    %760 = vmatprep.subr.mxu0 0.0
    %761 = vmatpush2.msra.mxu0 %v450
    %762 = vmatprep.subr.mxu0 0.0
    %763 = vmatpush2.msra.mxu0 %v449
    %764 = vmatprep.subr.mxu0 0.0
    %765 = vmatpush2.msra.mxu0 %v448
    %766 = vmatprep.subr.mxu0 0.0
    %767 = vmatpush2.msra.mxu0 %v447
    %768 = vmatprep.subr.mxu0 0.0
    %769 = vmatpush2.msra.mxu0 %v446
    %770 = vmatprep.subr.mxu0 0.0
    %771 = vmatpush2.msra.mxu0 %v445
    %772 = vmatprep.subr.mxu0 0.0
    %773 = vmatpush2.msra.mxu0 %v444
    %774 = vmatprep.subr.mxu0 0.0
    %775 = vmatpush2.msra.mxu0 %v443
    %776 = vmatprep.subr.mxu0 0.0
    %777 = vmatpush2.msra.mxu0 %v442
    %778 = vmatprep.subr.mxu0 0.0
    %779 = vmatpush2.msra.mxu0 %v441
    %780 = vmatprep.subr.mxu0 0.0
    %781 = vmatpush2.msra.mxu0 %v440
    %782 = vmatprep.subr.mxu0 0.0
    %783 = vmatpush2.msra.mxu0 %v439
    %784 = vmatprep.subr.mxu0 0.0
    %785 = vmatpush2.msra.mxu0 %v438
    %786 = vmatprep.subr.mxu0 0.0
    %787 = vmatpush2.msra.mxu0 %v437
    %788 = vmatprep.subr.mxu0 0.0
    %789 = vmatpush2.msra.mxu0 %v436
    %790 = vmatprep.mubr.f32.mxu0 %v379
    %791 = vmatmul.mubr.f32.gmra.mxu0 %v378
    %v792 = vpop.f32.mrf.mxu0
    %v793 = vadd.f32 %v723, %v792
    %v794 = vpop.f32.mrf.mxu0
    %795 = vdwg.mxu0
    %v796 = vld [vmem:[%s6] sm:$0x1]
    %v798 = vlaneseq
    %v799 = vshrl.u32 %v798, 7
    %v800 = vsub.s32 0, %v799
    %v801 = vrot.slane %v796, %v800
    %v803 = vadd.f32 %v793, %v801
    %v804 = vmax.f32 %v803, 0.0
    %v805 = vld [vmem:[%s7] sm:$0xff]
    %v806 = vld [vmem:[%s7 + $0x8] sm:$0xff]
    %v807 = vld [vmem:[%s7 + $0x10] sm:$0xff]
    %v808 = vld [vmem:[%s7 + $0x18] sm:$0xff]
    %v809 = vld [vmem:[%s7 + $0x20] sm:$0xff]
    %v810 = vld [vmem:[%s7 + $0x28] sm:$0xff]
    %v811 = vld [vmem:[%s7 + $0x30] sm:$0xff]
    %v812 = vld [vmem:[%s7 + $0x38] sm:$0xff]
    %v813 = vld [vmem:[%s7 + $0x40] sm:$0xff]
    %v814 = vld [vmem:[%s7 + $0x48] sm:$0xff]
    %v815 = vld [vmem:[%s7 + $0x50] sm:$0xff]
    %v816 = vld [vmem:[%s7 + $0x58] sm:$0xff]
    %v817 = vld [vmem:[%s7 + $0x60] sm:$0xff]
    %v818 = vld [vmem:[%s7 + $0x68] sm:$0xff]
    %v819 = vld [vmem:[%s7 + $0x70] sm:$0xff]
    %v820 = vld [vmem:[%s7 + $0x78] sm:$0xff]
    %v821 = vld [vmem:[%s8] sm:$0x1]
    %v823 = vlaneseq
    %v824 = vshrl.u32 %v823, 7
    %v825 = vsub.s32 0, %v824
    %v826 = vrot.slane %v821, %v825
    %828 = vmatprep.subr.mxu0 0.0
    %829 = vmatpush1.msra.mxu0 %v820
    %830 = vmatprep.subr.mxu0 0.0
    %831 = vmatpush1.msra.mxu0 %v819
    %832 = vmatprep.subr.mxu0 0.0
    %833 = vmatpush1.msra.mxu0 %v818
    %834 = vmatprep.subr.mxu0 0.0
    %835 = vmatpush1.msra.mxu0 %v817
    %836 = vmatprep.subr.mxu0 0.0
    %837 = vmatpush1.msra.mxu0 %v816
    %838 = vmatprep.subr.mxu0 0.0
    %839 = vmatpush1.msra.mxu0 %v815
    %840 = vmatprep.subr.mxu0 0.0
    %841 = vmatpush1.msra.mxu0 %v814
    %842 = vmatprep.subr.mxu0 0.0
    %843 = vmatpush1.msra.mxu0 %v813
    %844 = vmatprep.subr.mxu0 0.0
    %845 = vmatpush1.msra.mxu0 %v812
    %846 = vmatprep.subr.mxu0 0.0
    %847 = vmatpush1.msra.mxu0 %v811
    %848 = vmatprep.subr.mxu0 0.0
    %849 = vmatpush1.msra.mxu0 %v810
    %850 = vmatprep.subr.mxu0 0.0
    %851 = vmatpush1.msra.mxu0 %v809
    %852 = vmatprep.subr.mxu0 0.0
    %853 = vmatpush1.msra.mxu0 %v808
    %854 = vmatprep.subr.mxu0 0.0
    %855 = vmatpush1.msra.mxu0 %v807
    %856 = vmatprep.subr.mxu0 0.0
    %857 = vmatpush1.msra.mxu0 %v806
    %858 = vmatprep.subr.mxu0 0.0
    %859 = vmatpush1.msra.mxu0 %v805
    %860 = vmatprep.subr.mxu0 0.0
    %861 = vmatpush2.msra.mxu0 0.0
    %862 = vmatprep.subr.mxu0 0.0
    %863 = vmatpush2.msra.mxu0 0.0
    %864 = vmatprep.subr.mxu0 0.0
    %865 = vmatpush2.msra.mxu0 0.0
    %866 = vmatprep.subr.mxu0 0.0
    %867 = vmatpush2.msra.mxu0 0.0
    %868 = vmatprep.subr.mxu0 0.0
    %869 = vmatpush2.msra.mxu0 0.0
    %870 = vmatprep.subr.mxu0 0.0
    %871 = vmatpush2.msra.mxu0 0.0
    %872 = vmatprep.subr.mxu0 0.0
    %873 = vmatpush2.msra.mxu0 0.0
    %874 = vmatprep.subr.mxu0 0.0
    %875 = vmatpush2.msra.mxu0 0.0
    %876 = vmatprep.subr.mxu0 0.0
    %877 = vmatpush2.msra.mxu0 0.0
    %878 = vmatprep.subr.mxu0 0.0
    %879 = vmatpush2.msra.mxu0 0.0
    %880 = vmatprep.subr.mxu0 0.0
    %881 = vmatpush2.msra.mxu0 0.0
    %882 = vmatprep.subr.mxu0 0.0
    %883 = vmatpush2.msra.mxu0 0.0
    %884 = vmatprep.subr.mxu0 0.0
    %885 = vmatpush2.msra.mxu0 0.0
    %886 = vmatprep.subr.mxu0 0.0
    %887 = vmatpush2.msra.mxu0 0.0
    %888 = vmatprep.subr.mxu0 0.0
    %889 = vmatpush2.msra.mxu0 0.0
    %890 = vmatprep.subr.mxu0 0.0
    %891 = vmatpush2.msra.mxu0 0.0
    %892 = vmatprep.mubr.f32.mxu0 0.0
    %893 = vmatmul.mubr.f32.gmra.mxu0 %v804
    %v894 = vpop.f32.mrf.mxu0
    %v895 = vadd.f32 %v826, %v894
    %v896 = vpop.f32.mrf.mxu0
    %897 = vdwg.mxu0
    %v898 = vmax.f32 %v895, 0.0
    %v899 = vld [vmem:[%s9] sm:$0xff]
    %v900 = vld [vmem:[%s9 + $0x8] sm:$0xff]
    %v901 = vld [vmem:[%s9 + $0x10] sm:$0xff]
    %v902 = vld [vmem:[%s9 + $0x18] sm:$0xff]
    %v903 = vld [vmem:[%s9 + $0x20] sm:$0xff]
    %v904 = vld [vmem:[%s9 + $0x28] sm:$0xff]
    %v905 = vld [vmem:[%s9 + $0x30] sm:$0xff]
    %v906 = vld [vmem:[%s9 + $0x38] sm:$0xff]
    %v907 = vld [vmem:[%s10] sm:$0x1]
    %v909 = vlaneseq
    %v910 = vshrl.u32 %v909, 7
    %v911 = vsub.s32 0, %v910
    %v912 = vrot.slane %v907, %v911
    %vm914 = vcmask 523264
    %v916 = vsel %vm914, %v898, 0
    %918 = vmatprep.subr.mxu0 0.0
    %919 = vmatpush1.msra.mxu0 0.0
    %920 = vmatprep.subr.mxu0 0.0
    %921 = vmatpush1.msra.mxu0 0.0
    %922 = vmatprep.subr.mxu0 0.0
    %923 = vmatpush1.msra.mxu0 0.0
    %924 = vmatprep.subr.mxu0 0.0
    %925 = vmatpush1.msra.mxu0 0.0
    %926 = vmatprep.subr.mxu0 0.0
    %927 = vmatpush1.msra.mxu0 0.0
    %928 = vmatprep.subr.mxu0 0.0
    %929 = vmatpush1.msra.mxu0 0.0
    %930 = vmatprep.subr.mxu0 0.0
    %931 = vmatpush1.msra.mxu0 0.0
    %932 = vmatprep.subr.mxu0 0.0
    %933 = vmatpush1.msra.mxu0 0.0
    %934 = vmatprep.subr.mxu0 0.0
    %935 = vmatpush1.msra.mxu0 %v906
    %936 = vmatprep.subr.mxu0 0.0
    %937 = vmatpush1.msra.mxu0 %v905
    %938 = vmatprep.subr.mxu0 0.0
    %939 = vmatpush1.msra.mxu0 %v904
    %940 = vmatprep.subr.mxu0 0.0
    %941 = vmatpush1.msra.mxu0 %v903
    %942 = vmatprep.subr.mxu0 0.0
    %943 = vmatpush1.msra.mxu0 %v902
    %944 = vmatprep.subr.mxu0 0.0
    %945 = vmatpush1.msra.mxu0 %v901
    %946 = vmatprep.subr.mxu0 0.0
    %947 = vmatpush1.msra.mxu0 %v900
    %948 = vmatprep.subr.mxu0 0.0
    %949 = vmatpush1.msra.mxu0 %v899
    %950 = vmatprep.subr.mxu0 0.0
    %951 = vmatpush2.msra.mxu0 0.0
    %952 = vmatprep.subr.mxu0 0.0
    %953 = vmatpush2.msra.mxu0 0.0
    %954 = vmatprep.subr.mxu0 0.0
    %955 = vmatpush2.msra.mxu0 0.0
    %956 = vmatprep.subr.mxu0 0.0
    %957 = vmatpush2.msra.mxu0 0.0
    %958 = vmatprep.subr.mxu0 0.0
    %959 = vmatpush2.msra.mxu0 0.0
    %960 = vmatprep.subr.mxu0 0.0
    %961 = vmatpush2.msra.mxu0 0.0
    %962 = vmatprep.subr.mxu0 0.0
    %963 = vmatpush2.msra.mxu0 0.0
    %964 = vmatprep.subr.mxu0 0.0
    %965 = vmatpush2.msra.mxu0 0.0
    %966 = vmatprep.subr.mxu0 0.0
    %967 = vmatpush2.msra.mxu0 0.0
    %968 = vmatprep.subr.mxu0 0.0
    %969 = vmatpush2.msra.mxu0 0.0
    %970 = vmatprep.subr.mxu0 0.0
    %971 = vmatpush2.msra.mxu0 0.0
    %972 = vmatprep.subr.mxu0 0.0
    %973 = vmatpush2.msra.mxu0 0.0
    %974 = vmatprep.subr.mxu0 0.0
    %975 = vmatpush2.msra.mxu0 0.0
    %976 = vmatprep.subr.mxu0 0.0
    %977 = vmatpush2.msra.mxu0 0.0
    %978 = vmatprep.subr.mxu0 0.0
    %979 = vmatpush2.msra.mxu0 0.0
    %980 = vmatprep.subr.mxu0 0.0
    %981 = vmatpush2.msra.mxu0 0.0
    %982 = vmatprep.mubr.f32.mxu0 0.0
    %983 = vmatmul.mubr.f32.gmra.mxu0 %v916
    %v984 = vpop.f32.mrf.mxu0
    %v985 = vadd.f32 %v912, %v984
    %v986 = vpop.f32.mrf.mxu0
    %987 = vdwg.mxu0
    %vm988 = vcmask 58368
    %v989 = vsel %vm988, %v985, -inf
    %990 = vmax.xlane.f32.xlu0 %v989
    %v991 = vpop.xlane.xlu0 %990
    %v992 = vsub.f32 %v985, %v991
    %v993 = vmul.f32 %v992, 1.442695
    %v994 = vpow.pop %v993
    %v995 = vsel %vm988, %v994, 0.0
    %996 = vadd.xlane.f32.xlu0 %v995
    %v997 = vpop.xlane.xlu0 %996
    %v998 = vlog2.pop %v997
    %v999 = vmul.f32 %v998, 0.6931472
    %v1000 = vsub.f32 %v992, %v999
    %1001 = vst.msk [vmem:[#allocation2] sm:$0x3] %vm988, %v1000
    // Predicated region
    $region46: #{net_forward.3} parent=1 // pred_check
      _
    $region47: #{net_forward.3} parent=1 // pred_check_branch
      %1003 = sbr.rel (0) target = $region49
    $region48: #{net_forward.3} parent=1 // pred_region
      %s1005 = ssub.s32 32, 32
      %1006 = vsyncadd [#allocation3], %s1005
      %s1008 = sshll.u32 [#allocation2], 4
      %s1009 = int_to_ptr.vmem [resolvable:$true] %s1008
      %1011 = dma.vmem_to_hbm [thread:$0]  %s1009, 32, %s11, [#allocation3]
    $region49: #{net_forward.3} parent=1 // pred_fallthru
      _
    // Predicated region
    $region50: #{net_forward.3} parent=1 // pred_check
      _
    $region51: #{net_forward.3} parent=1 // pred_check_branch
      %1013 = sbr.rel (0) target = $region53
    $region52: #{net_forward.3} parent=1 // pred_region
      %1014 = dma.done [#allocation3], 32
    $region53: #{net_forward.3} parent=1 // pred_fallthru
      _
    %1015 = vsyncpa [#allocation3], 1

// kernel: net_forward.2
$region0: #{net_forward.2}
  #allocation0 [shape = 'u32[]', space=smem, size = 0x4, offset = 0x4, fixed_abs, tag = 'smem constant byte address 0x4 - core index']
  #allocation1 [shape = 'u32[144,128]{1,0:T(1,128)}', space=vmem, size = 0x12000, scoped, tag = 'internal scratch']
  %s0 = inlined_call_operand.vmem [shape: f32[24,100], index: 0, kind: input, shape index: {}]
  %s1 = inlined_call_operand.vmem [shape: f32[100,64], index: 1, kind: input, shape index: {}]
  %s2 = inlined_call_operand.vmem [shape: f32[1,64], index: 2, kind: input, shape index: {}]
  %s3 = inlined_call_operand.vmem [shape: f32[64,32], index: 3, kind: input, shape index: {}]
  %s4 = inlined_call_operand.vmem [shape: f32[1,32], index: 4, kind: input, shape index: {}]
  %s5 = inlined_call_operand.vmem [shape: s32[1,24], index: 5, kind: input, shape index: {}]
  %s6 = inlined_call_operand.vmem [shape: f32[24,32], index: 6, kind: input, shape index: {}]
  %s7 = inlined_call_operand.vmem [shape: f32[12,32], index: 7, kind: input, shape index: {}]
  %s8 = inlined_call_operand.vmem [shape: f32[32,128], index: 8, kind: input, shape index: {}]
  %s9 = inlined_call_operand.vmem [shape: f32[1,128], index: 9, kind: input, shape index: {}]
  %s10 = inlined_call_operand.vmem [shape: f32[128,512], index: 10, kind: input, shape index: {}]
  %s11 = inlined_call_operand.vmem [shape: f32[1,512], index: 11, kind: input, shape index: {}]
  %s12 = inlined_call_operand.vmem [shape: f32[512,1], index: 12, kind: input, shape index: {}]
  %s13 = inlined_call_operand.vmem [shape: f32[12,512], index: 13, kind: output, shape index: {0}]
  %s14 = inlined_call_operand.vmem [shape: f32[12,1], index: 14, kind: output, shape index: {1}]
  %15 = xla_tuple %s13, %s14
  %s16 = sld [smem:[#allocation0]]
  $region70: #{net_forward.2} parent=0
    _
  %s18 = ssub.s32 1, %s16
  %s19 = scalar_select 0, %s18, %s16
  // Predicated region
  $region2: #{net_forward.2} parent=0 // pred_check
    _
  $region3: #{net_forward.2} parent=0 // pred_check_branch
    %21 = sbr.rel (0) target = $region5
  $region4: #{net_forward.2} parent=0 // pred_region
    _
  $region5: #{net_forward.2} parent=0 // pred_fallthru
    _
  // Predicated region
  $region6: #{net_forward.2} parent=0 // pred_check
    _
  $region7: #{net_forward.2} parent=0 // pred_check_branch
    %23 = sbr.rel (0) target = $region9
  $region8: #{net_forward.2} parent=0 // pred_region
    _
  $region9: #{net_forward.2} parent=0 // pred_fallthru
    _
  // Predicated region
  $region10: #{net_forward.2} parent=0 // pred_check
    _
  $region11: #{net_forward.2} parent=0 // pred_check_branch
    %25 = sbr.rel (0) target = $region13
  $region12: #{net_forward.2} parent=0 // pred_region
    _
  $region13: #{net_forward.2} parent=0 // pred_fallthru
    _
  // Predicated region
  $region14: #{net_forward.2} parent=0 // pred_check
    _
  $region15: #{net_forward.2} parent=0 // pred_check_branch
    %27 = sbr.rel (0) target = $region17
  $region16: #{net_forward.2} parent=0 // pred_region
    _
  $region17: #{net_forward.2} parent=0 // pred_fallthru
    _
  // Predicated region
  $region18: #{net_forward.2} parent=0 // pred_check
    _
  $region19: #{net_forward.2} parent=0 // pred_check_branch
    %29 = sbr.rel (0) target = $region21
  $region20: #{net_forward.2} parent=0 // pred_region
    _
  $region21: #{net_forward.2} parent=0 // pred_fallthru
    _
  // Predicated region
  $region22: #{net_forward.2} parent=0 // pred_check
    _
  $region23: #{net_forward.2} parent=0 // pred_check_branch
    %31 = sbr.rel (0) target = $region25
  $region24: #{net_forward.2} parent=0 // pred_region
    _
  $region25: #{net_forward.2} parent=0 // pred_fallthru
    _
  // Predicated region
  $region26: #{net_forward.2} parent=0 // pred_check
    _
  $region27: #{net_forward.2} parent=0 // pred_check_branch
    %33 = sbr.rel (0) target = $region29
  $region28: #{net_forward.2} parent=0 // pred_region
    _
  $region29: #{net_forward.2} parent=0 // pred_fallthru
    _
  // Predicated region
  $region30: #{net_forward.2} parent=0 // pred_check
    _
  $region31: #{net_forward.2} parent=0 // pred_check_branch
    %35 = sbr.rel (0) target = $region33
  $region32: #{net_forward.2} parent=0 // pred_region
    _
  $region33: #{net_forward.2} parent=0 // pred_fallthru
    _
  // Predicated region
  $region34: #{net_forward.2} parent=0 // pred_check
    _
  $region35: #{net_forward.2} parent=0 // pred_check_branch
    %37 = sbr.rel (0) target = $region37
  $region36: #{net_forward.2} parent=0 // pred_region
    _
  $region37: #{net_forward.2} parent=0 // pred_fallthru
    _
  // Predicated region
  $region38: #{net_forward.2} parent=0 // pred_check
    _
  $region39: #{net_forward.2} parent=0 // pred_check_branch
    %39 = sbr.rel (0) target = $region41
  $region40: #{net_forward.2} parent=0 // pred_region
    _
  $region41: #{net_forward.2} parent=0 // pred_fallthru
    _
  // Predicated region
  $region42: #{net_forward.2} parent=0 // pred_check
    _
  $region43: #{net_forward.2} parent=0 // pred_check_branch
    %41 = sbr.rel (0) target = $region45
  $region44: #{net_forward.2} parent=0 // pred_region
    _
  $region45: #{net_forward.2} parent=0 // pred_fallthru
    _
  // Predicated region
  $region46: #{net_forward.2} parent=0 // pred_check
    _
  $region47: #{net_forward.2} parent=0 // pred_check_branch
    %43 = sbr.rel (0) target = $region49
  $region48: #{net_forward.2} parent=0 // pred_region
    _
  $region49: #{net_forward.2} parent=0 // pred_fallthru
    _
  // Predicated region
  $region50: #{net_forward.2} parent=0 // pred_check
    _
  $region51: #{net_forward.2} parent=0 // pred_check_branch
    %45 = sbr.rel (0) target = $region53
  $region52: #{net_forward.2} parent=0 // pred_region
    _
  $region53: #{net_forward.2} parent=0 // pred_fallthru
    _
  %v46 = vld [vmem:[%s0] sm:$0xff]
  %v47 = vld [vmem:[%s0 + $0x8] sm:$0xff]
  %v48 = vld [vmem:[%s0 + $0x10] sm:$0xff]
  %v49 = vld [vmem:[%s1] sm:$0xff]
  %v50 = vld [vmem:[%s1 + $0x8] sm:$0xff]
  %v51 = vld [vmem:[%s1 + $0x10] sm:$0xff]
  %v52 = vld [vmem:[%s1 + $0x18] sm:$0xff]
  %v53 = vld [vmem:[%s1 + $0x20] sm:$0xff]
  %v54 = vld [vmem:[%s1 + $0x28] sm:$0xff]
  %v55 = vld [vmem:[%s1 + $0x30] sm:$0xff]
  %v56 = vld [vmem:[%s1 + $0x38] sm:$0xff]
  %v57 = vld [vmem:[%s1 + $0x40] sm:$0xff]
  %v58 = vld [vmem:[%s1 + $0x48] sm:$0xff]
  %v59 = vld [vmem:[%s1 + $0x50] sm:$0xff]
  %v60 = vld [vmem:[%s1 + $0x58] sm:$0xff]
  %v61 = vld [vmem:[%s1 + $0x60] sm:$0xf]
  %v62 = vld [vmem:[%s2] sm:$0x1]
  %v64 = vlaneseq
  %v65 = vshrl.u32 %v64, 7
  %v66 = vsub.s32 0, %v65
  %v67 = vrot.slane %v62, %v66
  %vm69 = vcmask 818176
  %v71 = vsel %vm69, %v46, 0
  %v74 = vsel %vm69, %v47, 0
  %v77 = vsel %vm69, %v48, 0
  %vm79 = vcmask 1043456
  %v81 = vsel %vm79, %v61, 0
  %83 = vmatprep.subr.mxu0 0.0
  %84 = vmatpush1.msra.mxu0 0.0
  %85 = vmatprep.subr.mxu0 0.0
  %86 = vmatpush1.msra.mxu0 0.0
  %87 = vmatprep.subr.mxu0 0.0
  %88 = vmatpush1.msra.mxu0 0.0
  %89 = vmatprep.subr.mxu0 0.0
  %90 = vmatpush1.msra.mxu0 %v81
  %91 = vmatprep.subr.mxu0 0.0
  %92 = vmatpush1.msra.mxu0 %v60
  %93 = vmatprep.subr.mxu0 0.0
  %94 = vmatpush1.msra.mxu0 %v59
  %95 = vmatprep.subr.mxu0 0.0
  %96 = vmatpush1.msra.mxu0 %v58
  %97 = vmatprep.subr.mxu0 0.0
  %98 = vmatpush1.msra.mxu0 %v57
  %99 = vmatprep.subr.mxu0 0.0
  %100 = vmatpush1.msra.mxu0 %v56
  %101 = vmatprep.subr.mxu0 0.0
  %102 = vmatpush1.msra.mxu0 %v55
  %103 = vmatprep.subr.mxu0 0.0
  %104 = vmatpush1.msra.mxu0 %v54
  %105 = vmatprep.subr.mxu0 0.0
  %106 = vmatpush1.msra.mxu0 %v53
  %107 = vmatprep.subr.mxu0 0.0
  %108 = vmatpush1.msra.mxu0 %v52
  %109 = vmatprep.subr.mxu0 0.0
  %110 = vmatpush1.msra.mxu0 %v51
  %111 = vmatprep.subr.mxu0 0.0
  %112 = vmatpush1.msra.mxu0 %v50
  %113 = vmatprep.subr.mxu0 0.0
  %114 = vmatpush1.msra.mxu0 %v49
  %115 = vmatprep.subr.mxu0 0.0
  %116 = vmatpush2.msra.mxu0 0.0
  %117 = vmatprep.subr.mxu0 0.0
  %118 = vmatpush2.msra.mxu0 0.0
  %119 = vmatprep.subr.mxu0 0.0
  %120 = vmatpush2.msra.mxu0 0.0
  %121 = vmatprep.subr.mxu0 0.0
  %122 = vmatpush2.msra.mxu0 0.0
  %123 = vmatprep.subr.mxu0 0.0
  %124 = vmatpush2.msra.mxu0 0.0
  %125 = vmatprep.subr.mxu0 0.0
  %126 = vmatpush2.msra.mxu0 0.0
  %127 = vmatprep.subr.mxu0 0.0
  %128 = vmatpush2.msra.mxu0 0.0
  %129 = vmatprep.subr.mxu0 0.0
  %130 = vmatpush2.msra.mxu0 0.0
  %131 = vmatprep.subr.mxu0 0.0
  %132 = vmatpush2.msra.mxu0 0.0
  %133 = vmatprep.subr.mxu0 0.0
  %134 = vmatpush2.msra.mxu0 0.0
  %135 = vmatprep.subr.mxu0 0.0
  %136 = vmatpush2.msra.mxu0 0.0
  %137 = vmatprep.subr.mxu0 0.0
  %138 = vmatpush2.msra.mxu0 0.0
  %139 = vmatprep.subr.mxu0 0.0
  %140 = vmatpush2.msra.mxu0 0.0
  %141 = vmatprep.subr.mxu0 0.0
  %142 = vmatpush2.msra.mxu0 0.0
  %143 = vmatprep.subr.mxu0 0.0
  %144 = vmatpush2.msra.mxu0 0.0
  %145 = vmatprep.subr.mxu0 0.0
  %146 = vmatpush2.msra.mxu0 0.0
  %147 = vmatprep.mubr.f32.mxu0 0.0
  %148 = vmatmul.mubr.f32.gmra.mxu0 %v71
  %v149 = vpop.f32.mrf.mxu0
  %v150 = vadd.f32 %v67, %v149
  %v151 = vpop.f32.mrf.mxu0
  %152 = vmatprep.mubr.f32.mxu0 0.0
  %153 = vmatmul.mubr.f32.gmra.mxu0 %v74
  %v154 = vpop.f32.mrf.mxu0
  %v155 = vadd.f32 %v67, %v154
  %v156 = vpop.f32.mrf.mxu0
  %157 = vmatprep.mubr.f32.mxu0 0.0
  %158 = vmatmul.mubr.f32.gmra.mxu0 %v77
  %v159 = vpop.f32.mrf.mxu0
  %v160 = vadd.f32 %v67, %v159
  %v161 = vpop.f32.mrf.mxu0
  %162 = vdwg.mxu0
  %v163 = vmax.f32 %v150, 0.0
  %v164 = vmax.f32 %v155, 0.0
  %v165 = vmax.f32 %v160, 0.0
  %v166 = vld [vmem:[%s3] sm:$0xff]
  %v167 = vld [vmem:[%s3 + $0x8] sm:$0xff]
  %v168 = vld [vmem:[%s3 + $0x10] sm:$0xff]
  %v169 = vld [vmem:[%s3 + $0x18] sm:$0xff]
  %v170 = vld [vmem:[%s3 + $0x20] sm:$0xff]
  %v171 = vld [vmem:[%s3 + $0x28] sm:$0xff]
  %v172 = vld [vmem:[%s3 + $0x30] sm:$0xff]
  %v173 = vld [vmem:[%s3 + $0x38] sm:$0xff]
  %v174 = vld [vmem:[%s4] sm:$0x1]
  %v176 = vlaneseq
  %v177 = vshrl.u32 %v176, 7
  %v178 = vsub.s32 0, %v177
  %v179 = vrot.slane %v174, %v178
  %vm181 = vcmask 523264
  %v183 = vsel %vm181, %v163, 0
  %v186 = vsel %vm181, %v164, 0
  %v189 = vsel %vm181, %v165, 0
  %191 = vmatprep.subr.mxu0 0.0
  %192 = vmatpush1.msra.mxu0 0.0
  %193 = vmatprep.subr.mxu0 0.0
  %194 = vmatpush1.msra.mxu0 0.0
  %195 = vmatprep.subr.mxu0 0.0
  %196 = vmatpush1.msra.mxu0 0.0
  %197 = vmatprep.subr.mxu0 0.0
  %198 = vmatpush1.msra.mxu0 0.0
  %199 = vmatprep.subr.mxu0 0.0
  %200 = vmatpush1.msra.mxu0 0.0
  %201 = vmatprep.subr.mxu0 0.0
  %202 = vmatpush1.msra.mxu0 0.0
  %203 = vmatprep.subr.mxu0 0.0
  %204 = vmatpush1.msra.mxu0 0.0
  %205 = vmatprep.subr.mxu0 0.0
  %206 = vmatpush1.msra.mxu0 0.0
  %207 = vmatprep.subr.mxu0 0.0
  %208 = vmatpush1.msra.mxu0 %v173
  %209 = vmatprep.subr.mxu0 0.0
  %210 = vmatpush1.msra.mxu0 %v172
  %211 = vmatprep.subr.mxu0 0.0
  %212 = vmatpush1.msra.mxu0 %v171
  %213 = vmatprep.subr.mxu0 0.0
  %214 = vmatpush1.msra.mxu0 %v170
  %215 = vmatprep.subr.mxu0 0.0
  %216 = vmatpush1.msra.mxu0 %v169
  %217 = vmatprep.subr.mxu0 0.0
  %218 = vmatpush1.msra.mxu0 %v168
  %219 = vmatprep.subr.mxu0 0.0
  %220 = vmatpush1.msra.mxu0 %v167
  %221 = vmatprep.subr.mxu0 0.0
  %222 = vmatpush1.msra.mxu0 %v166
  %223 = vmatprep.subr.mxu0 0.0
  %224 = vmatpush2.msra.mxu0 0.0
  %225 = vmatprep.subr.mxu0 0.0
  %226 = vmatpush2.msra.mxu0 0.0
  %227 = vmatprep.subr.mxu0 0.0
  %228 = vmatpush2.msra.mxu0 0.0
  %229 = vmatprep.subr.mxu0 0.0
  %230 = vmatpush2.msra.mxu0 0.0
  %231 = vmatprep.subr.mxu0 0.0
  %232 = vmatpush2.msra.mxu0 0.0
  %233 = vmatprep.subr.mxu0 0.0
  %234 = vmatpush2.msra.mxu0 0.0
  %235 = vmatprep.subr.mxu0 0.0
  %236 = vmatpush2.msra.mxu0 0.0
  %237 = vmatprep.subr.mxu0 0.0
  %238 = vmatpush2.msra.mxu0 0.0
  %239 = vmatprep.subr.mxu0 0.0
  %240 = vmatpush2.msra.mxu0 0.0
  %241 = vmatprep.subr.mxu0 0.0
  %242 = vmatpush2.msra.mxu0 0.0
  %243 = vmatprep.subr.mxu0 0.0
  %244 = vmatpush2.msra.mxu0 0.0
  %245 = vmatprep.subr.mxu0 0.0
  %246 = vmatpush2.msra.mxu0 0.0
  %247 = vmatprep.subr.mxu0 0.0
  %248 = vmatpush2.msra.mxu0 0.0
  %249 = vmatprep.subr.mxu0 0.0
  %250 = vmatpush2.msra.mxu0 0.0
  %251 = vmatprep.subr.mxu0 0.0
  %252 = vmatpush2.msra.mxu0 0.0
  %253 = vmatprep.subr.mxu0 0.0
  %254 = vmatpush2.msra.mxu0 0.0
  %255 = vmatprep.mubr.f32.mxu0 0.0
  %256 = vmatmul.mubr.f32.gmra.mxu0 %v183
  %v257 = vpop.f32.mrf.mxu0
  %v258 = vadd.f32 %v179, %v257
  %v259 = vpop.f32.mrf.mxu0
  %260 = vmatprep.mubr.f32.mxu0 0.0
  %261 = vmatmul.mubr.f32.gmra.mxu0 %v186
  %v262 = vpop.f32.mrf.mxu0
  %v263 = vadd.f32 %v179, %v262
  %v264 = vpop.f32.mrf.mxu0
  %265 = vmatprep.mubr.f32.mxu0 0.0
  %266 = vmatmul.mubr.f32.gmra.mxu0 %v189
  %v267 = vpop.f32.mrf.mxu0
  %v268 = vadd.f32 %v179, %v267
  %v269 = vpop.f32.mrf.mxu0
  %270 = vdwg.mxu0
  %v271 = vmax.f32 %v258, 0.0
  %v272 = vmax.f32 %v263, 0.0
  %v273 = vmax.f32 %v268, 0.0
  %v274 = vld [vmem:[%s6] sm:$0xff]
  %v275 = vld [vmem:[%s6 + $0x8] sm:$0xff]
  %v276 = vld [vmem:[%s6 + $0x10] sm:$0xff]
  %v277 = vadd.f32 %v274, %v271
  %v278 = vadd.f32 %v275, %v272
  %v279 = vadd.f32 %v276, %v273
  %v280 = vmax.f32 %v277, 0.0
  %v281 = vmax.f32 %v278, 0.0
  %v282 = vmax.f32 %v279, 0.0
  %v283 = vlaneseq
  %v284 = vshrl.u32 %v283, 7
  %v285 = vadd.s32 %v284, 8
  %v286 = vld [vmem:[%s5] sm:$0x1]
  %v287 = vlaneseq
  %v288 = vshrl.u32 %v287, 7
  %v289 = vsub.s32 0, %v288
  %v290 = vrot.slane %v286, %v289
  %vm291 = vcmp.eq.s32.totalorder %v284, %v290
  %vm292 = vcmp.eq.s32.totalorder %v285, %v290
  %v293 = vsel %vm291, 1, 0
  %v294 = vsel %vm292, 1, 0
  %v295 = vcvt.s32.f32 %v293
  %v296 = vcvt.s32.f32 %v294
  %v297 = vld [vmem:[%s7] sm:$0xff]
  %v298 = vld [vmem:[%s7 + $0x8] sm:$0xf]
  %vm299 = vcmask 195584
  %v301 = vsel %vm299, %v295, 0
  %v304 = vsel %vm299, %v296, 0
  %306 = vmatprep.subr.mxu0 0.0
  %307 = vmatpush1.msra.mxu0 0.0
  %308 = vmatprep.subr.mxu0 0.0
  %309 = vmatpush1.msra.mxu0 0.0
  %310 = vmatprep.subr.mxu0 0.0
  %311 = vmatpush1.msra.mxu0 0.0
  %312 = vmatprep.subr.mxu0 0.0
  %313 = vmatpush1.msra.mxu0 0.0
  %314 = vmatprep.subr.mxu0 0.0
  %315 = vmatpush1.msra.mxu0 0.0
  %316 = vmatprep.subr.mxu0 0.0
  %317 = vmatpush1.msra.mxu0 0.0
  %318 = vmatprep.subr.mxu0 0.0
  %319 = vmatpush1.msra.mxu0 0.0
  %320 = vmatprep.subr.mxu0 0.0
  %321 = vmatpush1.msra.mxu0 0.0
  %322 = vmatprep.subr.mxu0 0.0
  %323 = vmatpush1.msra.mxu0 0.0
  %324 = vmatprep.subr.mxu0 0.0
  %325 = vmatpush1.msra.mxu0 0.0
  %326 = vmatprep.subr.mxu0 0.0
  %327 = vmatpush1.msra.mxu0 0.0
  %328 = vmatprep.subr.mxu0 0.0
  %329 = vmatpush1.msra.mxu0 0.0
  %330 = vmatprep.subr.mxu0 0.0
  %331 = vmatpush1.msra.mxu0 0.0
  %332 = vmatprep.subr.mxu0 0.0
  %333 = vmatpush1.msra.mxu0 %v282
  %334 = vmatprep.subr.mxu0 0.0
  %335 = vmatpush1.msra.mxu0 %v281
  %336 = vmatprep.subr.mxu0 0.0
  %337 = vmatpush1.msra.mxu0 %v280
  %338 = vmatprep.subr.mxu0 0.0
  %339 = vmatpush2.msra.mxu0 0.0
  %340 = vmatprep.subr.mxu0 0.0
  %341 = vmatpush2.msra.mxu0 0.0
  %342 = vmatprep.subr.mxu0 0.0
  %343 = vmatpush2.msra.mxu0 0.0
  %344 = vmatprep.subr.mxu0 0.0
  %345 = vmatpush2.msra.mxu0 0.0
  %346 = vmatprep.subr.mxu0 0.0
  %347 = vmatpush2.msra.mxu0 0.0
  %348 = vmatprep.subr.mxu0 0.0
  %349 = vmatpush2.msra.mxu0 0.0
  %350 = vmatprep.subr.mxu0 0.0
  %351 = vmatpush2.msra.mxu0 0.0
  %352 = vmatprep.subr.mxu0 0.0
  %353 = vmatpush2.msra.mxu0 0.0
  %354 = vmatprep.subr.mxu0 0.0
  %355 = vmatpush2.msra.mxu0 0.0
  %356 = vmatprep.subr.mxu0 0.0
  %357 = vmatpush2.msra.mxu0 0.0
  %358 = vmatprep.subr.mxu0 0.0
  %359 = vmatpush2.msra.mxu0 0.0
  %360 = vmatprep.subr.mxu0 0.0
  %361 = vmatpush2.msra.mxu0 0.0
  %362 = vmatprep.subr.mxu0 0.0
  %363 = vmatpush2.msra.mxu0 0.0
  %364 = vmatprep.subr.mxu0 0.0
  %365 = vmatpush2.msra.mxu0 0.0
  %366 = vmatprep.subr.mxu0 0.0
  %367 = vmatpush2.msra.mxu0 0.0
  %368 = vmatprep.subr.mxu0 0.0
  %369 = vmatpush2.msra.mxu0 0.0
  %370 = vmatprep.mubr.f32.mxu0 0.0
  %371 = vmatmul.mubr.f32.gmra.mxu0 %v301
  %v372 = vpop.f32.mrf.mxu0
  %v373 = vadd.f32 0.0, %v372
  %v374 = vpop.f32.mrf.mxu0
  %375 = vmatprep.mubr.f32.mxu0 0.0
  %376 = vmatmul.mubr.f32.gmra.mxu0 %v304
  %v377 = vpop.f32.mrf.mxu0
  %v378 = vadd.f32 0.0, %v377
  %v379 = vpop.f32.mrf.mxu0
  %380 = vdwg.mxu0
  %v381 = vadd.f32 %v297, %v373
  %v382 = vadd.f32 %v298, %v378
  %v383 = vld [vmem:[%s8] sm:$0xff]
  %v384 = vld [vmem:[%s8 + $0x8] sm:$0xff]
  %v385 = vld [vmem:[%s8 + $0x10] sm:$0xff]
  %v386 = vld [vmem:[%s8 + $0x18] sm:$0xff]
  %v387 = vld [vmem:[%s9] sm:$0x1]
  %v389 = vlaneseq
  %v390 = vshrl.u32 %v389, 7
  %v391 = vsub.s32 0, %v390
  %v392 = vrot.slane %v387, %v391
  %vm394 = vcmask 261120
  %v396 = vsel %vm394, %v381, 0
  %v399 = vsel %vm394, %v382, 0
  %401 = vmatprep.subr.mxu0 0.0
  %402 = vmatpush1.msra.mxu0 0.0
  %403 = vmatprep.subr.mxu0 0.0
  %404 = vmatpush1.msra.mxu0 0.0
  %405 = vmatprep.subr.mxu0 0.0
  %406 = vmatpush1.msra.mxu0 0.0
  %407 = vmatprep.subr.mxu0 0.0
  %408 = vmatpush1.msra.mxu0 0.0
  %409 = vmatprep.subr.mxu0 0.0
  %410 = vmatpush1.msra.mxu0 0.0
  %411 = vmatprep.subr.mxu0 0.0
  %412 = vmatpush1.msra.mxu0 0.0
  %413 = vmatprep.subr.mxu0 0.0
  %414 = vmatpush1.msra.mxu0 0.0
  %415 = vmatprep.subr.mxu0 0.0
  %416 = vmatpush1.msra.mxu0 0.0
  %417 = vmatprep.subr.mxu0 0.0
  %418 = vmatpush1.msra.mxu0 0.0
  %419 = vmatprep.subr.mxu0 0.0
  %420 = vmatpush1.msra.mxu0 0.0
  %421 = vmatprep.subr.mxu0 0.0
  %422 = vmatpush1.msra.mxu0 0.0
  %423 = vmatprep.subr.mxu0 0.0
  %424 = vmatpush1.msra.mxu0 0.0
  %425 = vmatprep.subr.mxu0 0.0
  %426 = vmatpush1.msra.mxu0 %v386
  %427 = vmatprep.subr.mxu0 0.0
  %428 = vmatpush1.msra.mxu0 %v385
  %429 = vmatprep.subr.mxu0 0.0
  %430 = vmatpush1.msra.mxu0 %v384
  %431 = vmatprep.subr.mxu0 0.0
  %432 = vmatpush1.msra.mxu0 %v383
  %433 = vmatprep.subr.mxu0 0.0
  %434 = vmatpush2.msra.mxu0 0.0
  %435 = vmatprep.subr.mxu0 0.0
  %436 = vmatpush2.msra.mxu0 0.0
  %437 = vmatprep.subr.mxu0 0.0
  %438 = vmatpush2.msra.mxu0 0.0
  %439 = vmatprep.subr.mxu0 0.0
  %440 = vmatpush2.msra.mxu0 0.0
  %441 = vmatprep.subr.mxu0 0.0
  %442 = vmatpush2.msra.mxu0 0.0
  %443 = vmatprep.subr.mxu0 0.0
  %444 = vmatpush2.msra.mxu0 0.0
  %445 = vmatprep.subr.mxu0 0.0
  %446 = vmatpush2.msra.mxu0 0.0
  %447 = vmatprep.subr.mxu0 0.0
  %448 = vmatpush2.msra.mxu0 0.0
  %449 = vmatprep.subr.mxu0 0.0
  %450 = vmatpush2.msra.mxu0 0.0
  %451 = vmatprep.subr.mxu0 0.0
  %452 = vmatpush2.msra.mxu0 0.0
  %453 = vmatprep.subr.mxu0 0.0
  %454 = vmatpush2.msra.mxu0 0.0
  %455 = vmatprep.subr.mxu0 0.0
  %456 = vmatpush2.msra.mxu0 0.0
  %457 = vmatprep.subr.mxu0 0.0
  %458 = vmatpush2.msra.mxu0 0.0
  %459 = vmatprep.subr.mxu0 0.0
  %460 = vmatpush2.msra.mxu0 0.0
  %461 = vmatprep.subr.mxu0 0.0
  %462 = vmatpush2.msra.mxu0 0.0
  %463 = vmatprep.subr.mxu0 0.0
  %464 = vmatpush2.msra.mxu0 0.0
  %465 = vmatprep.mubr.f32.mxu0 0.0
  %466 = vmatmul.mubr.f32.gmra.mxu0 %v396
  %v467 = vpop.f32.mrf.mxu0
  %v468 = vadd.f32 %v392, %v467
  %v469 = vpop.f32.mrf.mxu0
  %470 = vmatprep.mubr.f32.mxu0 0.0
  %471 = vmatmul.mubr.f32.gmra.mxu0 %v399
  %v472 = vpop.f32.mrf.mxu0
  %v473 = vadd.f32 %v392, %v472
  %v474 = vpop.f32.mrf.mxu0
  %475 = vdwg.mxu0
  %v476 = vmax.f32 %v468, 0.0
  %v477 = vmax.f32 %v473, 0.0
  %v478 = vld [vmem:[%s10] sm:$0xff]
  %v479 = vld [vmem:[%s10 + $0x8] sm:$0xff]
  %v480 = vld [vmem:[%s10 + $0x10] sm:$0xff]
  %v481 = vld [vmem:[%s10 + $0x18] sm:$0xff]
  %v482 = vld [vmem:[%s10 + $0x20] sm:$0xff]
  %v483 = vld [vmem:[%s10 + $0x28] sm:$0xff]
  %v484 = vld [vmem:[%s10 + $0x30] sm:$0xff]
  %v485 = vld [vmem:[%s10 + $0x38] sm:$0xff]
  %v486 = vld [vmem:[%s10 + $0x40] sm:$0xff]
  %v487 = vld [vmem:[%s10 + $0x48] sm:$0xff]
  %v488 = vld [vmem:[%s10 + $0x50] sm:$0xff]
  %v489 = vld [vmem:[%s10 + $0x58] sm:$0xff]
  %v490 = vld [vmem:[%s10 + $0x60] sm:$0xff]
  %v491 = vld [vmem:[%s10 + $0x68] sm:$0xff]
  %v492 = vld [vmem:[%s10 + $0x70] sm:$0xff]
  %v493 = vld [vmem:[%s10 + $0x78] sm:$0xff]
  %v494 = vld [vmem:[%s10 + $0x80] sm:$0xff]
  %v495 = vld [vmem:[%s10 + $0x88] sm:$0xff]
  %v496 = vld [vmem:[%s10 + $0x90] sm:$0xff]
  %v497 = vld [vmem:[%s10 + $0x98] sm:$0xff]
  %v498 = vld [vmem:[%s10 + $0xa0] sm:$0xff]
  %v499 = vld [vmem:[%s10 + $0xa8] sm:$0xff]
  %v500 = vld [vmem:[%s10 + $0xb0] sm:$0xff]
  %v501 = vld [vmem:[%s10 + $0xb8] sm:$0xff]
  %v502 = vld [vmem:[%s10 + $0xc0] sm:$0xff]
  %v503 = vld [vmem:[%s10 + $0xc8] sm:$0xff]
  %v504 = vld [vmem:[%s10 + $0xd0] sm:$0xff]
  %v505 = vld [vmem:[%s10 + $0xd8] sm:$0xff]
  %v506 = vld [vmem:[%s10 + $0xe0] sm:$0xff]
  %v507 = vld [vmem:[%s10 + $0xe8] sm:$0xff]
  %v508 = vld [vmem:[%s10 + $0xf0] sm:$0xff]
  %v509 = vld [vmem:[%s10 + $0xf8] sm:$0xff]
  %v510 = vld [vmem:[%s10 + $0x100] sm:$0xff]
  %v511 = vld [vmem:[%s10 + $0x108] sm:$0xff]
  %v512 = vld [vmem:[%s10 + $0x110] sm:$0xff]
  %v513 = vld [vmem:[%s10 + $0x118] sm:$0xff]
  %v514 = vld [vmem:[%s10 + $0x120] sm:$0xff]
  %v515 = vld [vmem:[%s10 + $0x128] sm:$0xff]
  %v516 = vld [vmem:[%s10 + $0x130] sm:$0xff]
  %v517 = vld [vmem:[%s10 + $0x138] sm:$0xff]
  %v518 = vld [vmem:[%s10 + $0x140] sm:$0xff]
  %v519 = vld [vmem:[%s10 + $0x148] sm:$0xff]
  %v520 = vld [vmem:[%s10 + $0x150] sm:$0xff]
  %v521 = vld [vmem:[%s10 + $0x158] sm:$0xff]
  %v522 = vld [vmem:[%s10 + $0x160] sm:$0xff]
  %v523 = vld [vmem:[%s10 + $0x168] sm:$0xff]
  %v524 = vld [vmem:[%s10 + $0x170] sm:$0xff]
  %v525 = vld [vmem:[%s10 + $0x178] sm:$0xff]
  %v526 = vld [vmem:[%s10 + $0x180] sm:$0xff]
  %v527 = vld [vmem:[%s10 + $0x188] sm:$0xff]
  %v528 = vld [vmem:[%s10 + $0x190] sm:$0xff]
  %v529 = vld [vmem:[%s10 + $0x198] sm:$0xff]
  %v530 = vld [vmem:[%s10 + $0x1a0] sm:$0xff]
  %v531 = vld [vmem:[%s10 + $0x1a8] sm:$0xff]
  %v532 = vld [vmem:[%s10 + $0x1b0] sm:$0xff]
  %v533 = vld [vmem:[%s10 + $0x1b8] sm:$0xff]
  %v534 = vld [vmem:[%s10 + $0x1c0] sm:$0xff]
  %v535 = vld [vmem:[%s10 + $0x1c8] sm:$0xff]
  %v536 = vld [vmem:[%s10 + $0x1d0] sm:$0xff]
  %v537 = vld [vmem:[%s10 + $0x1d8] sm:$0xff]
  %v538 = vld [vmem:[%s10 + $0x1e0] sm:$0xff]
  %v539 = vld [vmem:[%s10 + $0x1e8] sm:$0xff]
  %v540 = vld [vmem:[%s10 + $0x1f0] sm:$0xff]
  %v541 = vld [vmem:[%s10 + $0x1f8] sm:$0xff]
  %v542 = vld [vmem:[%s11] sm:$0xf]
  %v544 = vlaneseq
  %v545 = vshrl.u32 %v544, 7
  %v546 = vsub.s32 0, %v545
  %v547 = vrot.slane %v542, %v546
  %v548 = vlaneseq
  %v549 = vshrl.u32 %v548, 7
  %v550 = vsub.s32 1, %v549
  %v551 = vrot.slane %v542, %v550
  %v552 = vlaneseq
  %v553 = vshrl.u32 %v552, 7
  %v554 = vsub.s32 2, %v553
  %v555 = vrot.slane %v542, %v554
  %v556 = vlaneseq
  %v557 = vshrl.u32 %v556, 7
  %v558 = vsub.s32 3, %v557
  %v559 = vrot.slane %v542, %v558
  %564 = vmatprep.subr.mxu0 %v539
  %565 = vmatpush1.msra.mxu0 %v538
  %566 = vmatprep.subr.mxu0 %v535
  %567 = vmatpush1.msra.mxu0 %v534
  %568 = vmatprep.subr.mxu0 %v531
  %569 = vmatpush1.msra.mxu0 %v530
  %570 = vmatprep.subr.mxu0 %v527
  %571 = vmatpush1.msra.mxu0 %v526
  %572 = vmatprep.subr.mxu0 %v523
  %573 = vmatpush1.msra.mxu0 %v522
  %574 = vmatprep.subr.mxu0 %v519
  %575 = vmatpush1.msra.mxu0 %v518
  %576 = vmatprep.subr.mxu0 %v515
  %577 = vmatpush1.msra.mxu0 %v514
  %578 = vmatprep.subr.mxu0 %v511
  %579 = vmatpush1.msra.mxu0 %v510
  %580 = vmatprep.subr.mxu0 %v507
  %581 = vmatpush1.msra.mxu0 %v506
  %582 = vmatprep.subr.mxu0 %v503
  %583 = vmatpush1.msra.mxu0 %v502
  %584 = vmatprep.subr.mxu0 %v499
  %585 = vmatpush1.msra.mxu0 %v498
  %586 = vmatprep.subr.mxu0 %v495
  %587 = vmatpush1.msra.mxu0 %v494
  %588 = vmatprep.subr.mxu0 %v491
  %589 = vmatpush1.msra.mxu0 %v490
  %590 = vmatprep.subr.mxu0 %v487
  %591 = vmatpush1.msra.mxu0 %v486
  %592 = vmatprep.subr.mxu0 %v483
  %593 = vmatpush1.msra.mxu0 %v482
  %594 = vmatprep.subr.mxu0 %v479
  %595 = vmatpush1.msra.mxu0 %v478
  %596 = vmatprep.subr.mxu0 0.0
  %597 = vmatpush2.msra.mxu0 0.0
  %598 = vmatprep.subr.mxu0 0.0
  %599 = vmatpush2.msra.mxu0 0.0
  %600 = vmatprep.subr.mxu0 0.0
  %601 = vmatpush2.msra.mxu0 0.0
  %602 = vmatprep.subr.mxu0 0.0
  %603 = vmatpush2.msra.mxu0 0.0
  %604 = vmatprep.subr.mxu0 0.0
  %605 = vmatpush2.msra.mxu0 0.0
  %606 = vmatprep.subr.mxu0 0.0
  %607 = vmatpush2.msra.mxu0 0.0
  %608 = vmatprep.subr.mxu0 0.0
  %609 = vmatpush2.msra.mxu0 0.0
  %610 = vmatprep.subr.mxu0 0.0
  %611 = vmatpush2.msra.mxu0 0.0
  %612 = vmatprep.subr.mxu0 0.0
  %613 = vmatpush2.msra.mxu0 0.0
  %614 = vmatprep.subr.mxu0 0.0
  %615 = vmatpush2.msra.mxu0 0.0
  %616 = vmatprep.subr.mxu0 0.0
  %617 = vmatpush2.msra.mxu0 0.0
  %618 = vmatprep.subr.mxu0 0.0
  %619 = vmatpush2.msra.mxu0 0.0
  %620 = vmatprep.subr.mxu0 0.0
  %621 = vmatpush2.msra.mxu0 0.0
  %622 = vmatprep.subr.mxu0 0.0
  %623 = vmatpush2.msra.mxu0 0.0
  %624 = vmatprep.subr.mxu0 0.0
  %625 = vmatpush2.msra.mxu0 0.0
  %626 = vmatprep.subr.mxu0 0.0
  %627 = vmatpush2.msra.mxu0 0.0
  %628 = vmatprep.mubr.f32.mxu0 0.0
  %629 = vmatmul.mubr.f32.gmra.mxu0 %v476
  %v630 = vpop.f32.mrf.mxu0
  %v631 = vadd.f32 %v547, %v630
  %v632 = vpop.f32.mrf.mxu0
  %v633 = vadd.f32 %v551, %v632
  %634 = vmatprep.mubr.f32.mxu0 0.0
  %635 = vmatmul.mubr.f32.gmra.mxu0 %v477
  %v636 = vpop.f32.mrf.mxu0
  %v637 = vadd.f32 %v547, %v636
  %v638 = vpop.f32.mrf.mxu0
  %v639 = vadd.f32 %v551, %v638
  %640 = vdwg.mxu0
  %641 = vmatprep.subr.mxu0 %v541
  %642 = vmatpush1.msra.mxu0 %v540
  %643 = vmatprep.subr.mxu0 %v537
  %644 = vmatpush1.msra.mxu0 %v536
  %645 = vmatprep.subr.mxu0 %v533
  %646 = vmatpush1.msra.mxu0 %v532
  %647 = vmatprep.subr.mxu0 %v529
  %648 = vmatpush1.msra.mxu0 %v528
  %649 = vmatprep.subr.mxu0 %v525
  %650 = vmatpush1.msra.mxu0 %v524
  %651 = vmatprep.subr.mxu0 %v521
  %652 = vmatpush1.msra.mxu0 %v520
  %653 = vmatprep.subr.mxu0 %v517
  %654 = vmatpush1.msra.mxu0 %v516
  %655 = vmatprep.subr.mxu0 %v513
  %656 = vmatpush1.msra.mxu0 %v512
  %657 = vmatprep.subr.mxu0 %v509
  %658 = vmatpush1.msra.mxu0 %v508
  %659 = vmatprep.subr.mxu0 %v505
  %660 = vmatpush1.msra.mxu0 %v504
  %661 = vmatprep.subr.mxu0 %v501
  %662 = vmatpush1.msra.mxu0 %v500
  %663 = vmatprep.subr.mxu0 %v497
  %664 = vmatpush1.msra.mxu0 %v496
  %665 = vmatprep.subr.mxu0 %v493
  %666 = vmatpush1.msra.mxu0 %v492
  %667 = vmatprep.subr.mxu0 %v489
  %668 = vmatpush1.msra.mxu0 %v488
  %669 = vmatprep.subr.mxu0 %v485
  %670 = vmatpush1.msra.mxu0 %v484
  %671 = vmatprep.subr.mxu0 %v481
  %672 = vmatpush1.msra.mxu0 %v480
  %673 = vmatprep.subr.mxu0 0.0
  %674 = vmatpush2.msra.mxu0 0.0
  %675 = vmatprep.subr.mxu0 0.0
  %676 = vmatpush2.msra.mxu0 0.0
  %677 = vmatprep.subr.mxu0 0.0
  %678 = vmatpush2.msra.mxu0 0.0
  %679 = vmatprep.subr.mxu0 0.0
  %680 = vmatpush2.msra.mxu0 0.0
  %681 = vmatprep.subr.mxu0 0.0
  %682 = vmatpush2.msra.mxu0 0.0
  %683 = vmatprep.subr.mxu0 0.0
  %684 = vmatpush2.msra.mxu0 0.0
  %685 = vmatprep.subr.mxu0 0.0
  %686 = vmatpush2.msra.mxu0 0.0
  %687 = vmatprep.subr.mxu0 0.0
  %688 = vmatpush2.msra.mxu0 0.0
  %689 = vmatprep.subr.mxu0 0.0
  %690 = vmatpush2.msra.mxu0 0.0
  %691 = vmatprep.subr.mxu0 0.0
  %692 = vmatpush2.msra.mxu0 0.0
  %693 = vmatprep.subr.mxu0 0.0
  %694 = vmatpush2.msra.mxu0 0.0
  %695 = vmatprep.subr.mxu0 0.0
  %696 = vmatpush2.msra.mxu0 0.0
  %697 = vmatprep.subr.mxu0 0.0
  %698 = vmatpush2.msra.mxu0 0.0
  %699 = vmatprep.subr.mxu0 0.0
  %700 = vmatpush2.msra.mxu0 0.0
  %701 = vmatprep.subr.mxu0 0.0
  %702 = vmatpush2.msra.mxu0 0.0
  %703 = vmatprep.subr.mxu0 0.0
  %704 = vmatpush2.msra.mxu0 0.0
  %705 = vmatprep.mubr.f32.mxu0 0.0
  %706 = vmatmul.mubr.f32.gmra.mxu0 %v476
  %v707 = vpop.f32.mrf.mxu0
  %v708 = vadd.f32 %v555, %v707
  %v709 = vpop.f32.mrf.mxu0
  %v710 = vadd.f32 %v559, %v709
  %711 = vmatprep.mubr.f32.mxu0 0.0
  %712 = vmatmul.mubr.f32.gmra.mxu0 %v477
  %v713 = vpop.f32.mrf.mxu0
  %v714 = vadd.f32 %v555, %v713
  %v715 = vpop.f32.mrf.mxu0
  %v716 = vadd.f32 %v559, %v715
  %717 = vdwg.mxu0
  %v718 = vmax.f32 %v631, 0.0
  %v719 = vmax.f32 %v633, 0.0
  %v720 = vmax.f32 %v708, 0.0
  %v721 = vmax.f32 %v710, 0.0
  %v722 = vmax.f32 %v637, 0.0
  %v723 = vmax.f32 %v639, 0.0
  %v724 = vmax.f32 %v714, 0.0
  %v725 = vmax.f32 %v716, 0.0
  %726 = vst [vmem:[%s13] sm:$0xff] %v718
  %727 = vst [vmem:[%s13 + $0x8] sm:$0xff] %v719
  %728 = vst [vmem:[%s13 + $0x10] sm:$0xff] %v720
  %729 = vst [vmem:[%s13 + $0x18] sm:$0xff] %v721
  %730 = vst [vmem:[%s13 + $0x20] sm:$0xf] %v722
  %731 = vst [vmem:[%s13 + $0x28] sm:$0xf] %v723
  %732 = vst [vmem:[%s13 + $0x30] sm:$0xf] %v724
  %733 = vst [vmem:[%s13 + $0x38] sm:$0xf] %v725
  %v734 = vld [vmem:[%s12] sm:$0xff]
  %v735 = vld [vmem:[%s12 + $0x8] sm:$0xff]
  %v736 = vld [vmem:[%s12 + $0x10] sm:$0xff]
  %v737 = vld [vmem:[%s12 + $0x18] sm:$0xff]
  %v738 = vld [vmem:[%s12 + $0x20] sm:$0xff]
  %v739 = vld [vmem:[%s12 + $0x28] sm:$0xff]
  %v740 = vld [vmem:[%s12 + $0x30] sm:$0xff]
  %v741 = vld [vmem:[%s12 + $0x38] sm:$0xff]
  %v742 = vld [vmem:[%s12 + $0x40] sm:$0xff]
  %v743 = vld [vmem:[%s12 + $0x48] sm:$0xff]
  %v744 = vld [vmem:[%s12 + $0x50] sm:$0xff]
  %v745 = vld [vmem:[%s12 + $0x58] sm:$0xff]
  %v746 = vld [vmem:[%s12 + $0x60] sm:$0xff]
  %v747 = vld [vmem:[%s12 + $0x68] sm:$0xff]
  %v748 = vld [vmem:[%s12 + $0x70] sm:$0xff]
  %v749 = vld [vmem:[%s12 + $0x78] sm:$0xff]
  %v750 = vld [vmem:[%s12 + $0x80] sm:$0xff]
  %v751 = vld [vmem:[%s12 + $0x88] sm:$0xff]
  %v752 = vld [vmem:[%s12 + $0x90] sm:$0xff]
  %v753 = vld [vmem:[%s12 + $0x98] sm:$0xff]
  %v754 = vld [vmem:[%s12 + $0xa0] sm:$0xff]
  %v755 = vld [vmem:[%s12 + $0xa8] sm:$0xff]
  %v756 = vld [vmem:[%s12 + $0xb0] sm:$0xff]
  %v757 = vld [vmem:[%s12 + $0xb8] sm:$0xff]
  %v758 = vld [vmem:[%s12 + $0xc0] sm:$0xff]
  %v759 = vld [vmem:[%s12 + $0xc8] sm:$0xff]
  %v760 = vld [vmem:[%s12 + $0xd0] sm:$0xff]
  %v761 = vld [vmem:[%s12 + $0xd8] sm:$0xff]
  %v762 = vld [vmem:[%s12 + $0xe0] sm:$0xff]
  %v763 = vld [vmem:[%s12 + $0xe8] sm:$0xff]
  %v764 = vld [vmem:[%s12 + $0xf0] sm:$0xff]
  %v765 = vld [vmem:[%s12 + $0xf8] sm:$0xff]
  %v766 = vld [vmem:[%s12 + $0x100] sm:$0xff]
  %v767 = vld [vmem:[%s12 + $0x108] sm:$0xff]
  %v768 = vld [vmem:[%s12 + $0x110] sm:$0xff]
  %v769 = vld [vmem:[%s12 + $0x118] sm:$0xff]
  %v770 = vld [vmem:[%s12 + $0x120] sm:$0xff]
  %v771 = vld [vmem:[%s12 + $0x128] sm:$0xff]
  %v772 = vld [vmem:[%s12 + $0x130] sm:$0xff]
  %v773 = vld [vmem:[%s12 + $0x138] sm:$0xff]
  %v774 = vld [vmem:[%s12 + $0x140] sm:$0xff]
  %v775 = vld [vmem:[%s12 + $0x148] sm:$0xff]
  %v776 = vld [vmem:[%s12 + $0x150] sm:$0xff]
  %v777 = vld [vmem:[%s12 + $0x158] sm:$0xff]
  %v778 = vld [vmem:[%s12 + $0x160] sm:$0xff]
  %v779 = vld [vmem:[%s12 + $0x168] sm:$0xff]
  %v780 = vld [vmem:[%s12 + $0x170] sm:$0xff]
  %v781 = vld [vmem:[%s12 + $0x178] sm:$0xff]
  %v782 = vld [vmem:[%s12 + $0x180] sm:$0xff]
  %v783 = vld [vmem:[%s12 + $0x188] sm:$0xff]
  %v784 = vld [vmem:[%s12 + $0x190] sm:$0xff]
  %v785 = vld [vmem:[%s12 + $0x198] sm:$0xff]
  %v786 = vld [vmem:[%s12 + $0x1a0] sm:$0xff]
  %v787 = vld [vmem:[%s12 + $0x1a8] sm:$0xff]
  %v788 = vld [vmem:[%s12 + $0x1b0] sm:$0xff]
  %v789 = vld [vmem:[%s12 + $0x1b8] sm:$0xff]
  %v790 = vld [vmem:[%s12 + $0x1c0] sm:$0xff]
  %v791 = vld [vmem:[%s12 + $0x1c8] sm:$0xff]
  %v792 = vld [vmem:[%s12 + $0x1d0] sm:$0xff]
  %v793 = vld [vmem:[%s12 + $0x1d8] sm:$0xff]
  %v794 = vld [vmem:[%s12 + $0x1e0] sm:$0xff]
  %v795 = vld [vmem:[%s12 + $0x1e8] sm:$0xff]
  %v796 = vld [vmem:[%s12 + $0x1f0] sm:$0xff]
  %v797 = vld [vmem:[%s12 + $0x1f8] sm:$0xff]
  %798 = vmatprep.subr.mxu0 0.0
  %799 = vmatpush1.msra.mxu0 %v749
  %800 = vmatprep.subr.mxu0 0.0
  %801 = vmatpush1.msra.mxu0 %v748
  %802 = vmatprep.subr.mxu0 0.0
  %803 = vmatpush1.msra.mxu0 %v747
  %804 = vmatprep.subr.mxu0 0.0
  %805 = vmatpush1.msra.mxu0 %v746
  %806 = vmatprep.subr.mxu0 0.0
  %807 = vmatpush1.msra.mxu0 %v745
  %808 = vmatprep.subr.mxu0 0.0
  %809 = vmatpush1.msra.mxu0 %v744
  %810 = vmatprep.subr.mxu0 0.0
  %811 = vmatpush1.msra.mxu0 %v743
  %812 = vmatprep.subr.mxu0 0.0
  %813 = vmatpush1.msra.mxu0 %v742
  %814 = vmatprep.subr.mxu0 0.0
  %815 = vmatpush1.msra.mxu0 %v741
  %816 = vmatprep.subr.mxu0 0.0
  %817 = vmatpush1.msra.mxu0 %v740
  %818 = vmatprep.subr.mxu0 0.0
  %819 = vmatpush1.msra.mxu0 %v739
  %820 = vmatprep.subr.mxu0 0.0
  %821 = vmatpush1.msra.mxu0 %v738
  %822 = vmatprep.subr.mxu0 0.0
  %823 = vmatpush1.msra.mxu0 %v737
  %824 = vmatprep.subr.mxu0 0.0
  %825 = vmatpush1.msra.mxu0 %v736
  %826 = vmatprep.subr.mxu0 0.0
  %827 = vmatpush1.msra.mxu0 %v735
  %828 = vmatprep.subr.mxu0 0.0
  %829 = vmatpush1.msra.mxu0 %v734
  %830 = vmatprep.subr.mxu0 0.0
  %831 = vmatpush2.msra.mxu0 %v765
  %832 = vmatprep.subr.mxu0 0.0
  %833 = vmatpush2.msra.mxu0 %v764
  %834 = vmatprep.subr.mxu0 0.0
  %835 = vmatpush2.msra.mxu0 %v763
  %836 = vmatprep.subr.mxu0 0.0
  %837 = vmatpush2.msra.mxu0 %v762
  %838 = vmatprep.subr.mxu0 0.0
  %839 = vmatpush2.msra.mxu0 %v761
  %840 = vmatprep.subr.mxu0 0.0
  %841 = vmatpush2.msra.mxu0 %v760
  %842 = vmatprep.subr.mxu0 0.0
  %843 = vmatpush2.msra.mxu0 %v759
  %844 = vmatprep.subr.mxu0 0.0
  %845 = vmatpush2.msra.mxu0 %v758
  %846 = vmatprep.subr.mxu0 0.0
  %847 = vmatpush2.msra.mxu0 %v757
  %848 = vmatprep.subr.mxu0 0.0
  %849 = vmatpush2.msra.mxu0 %v756
  %850 = vmatprep.subr.mxu0 0.0
  %851 = vmatpush2.msra.mxu0 %v755
  %852 = vmatprep.subr.mxu0 0.0
  %853 = vmatpush2.msra.mxu0 %v754
  %854 = vmatprep.subr.mxu0 0.0
  %855 = vmatpush2.msra.mxu0 %v753
  %856 = vmatprep.subr.mxu0 0.0
  %857 = vmatpush2.msra.mxu0 %v752
  %858 = vmatprep.subr.mxu0 0.0
  %859 = vmatpush2.msra.mxu0 %v751
  %860 = vmatprep.subr.mxu0 0.0
  %861 = vmatpush2.msra.mxu0 %v750
  %862 = vmatprep.mubr.f32.mxu0 %v719
  %863 = vmatmul.mubr.f32.gmra.mxu0 %v718
  %v864 = vpop.f32.mrf.mxu0
  %v865 = vadd.f32 0.0, %v864
  %v866 = vpop.f32.mrf.mxu0
  %867 = vmatprep.mubr.f32.mxu0 %v723
  %868 = vmatmul.mubr.f32.gmra.mxu0 %v722
  %v869 = vpop.f32.mrf.mxu0
  %v870 = vadd.f32 0.0, %v869
  %v871 = vpop.f32.mrf.mxu0
  %872 = vdwg.mxu0
  %873 = vmatprep.subr.mxu0 0.0
  %874 = vmatpush1.msra.mxu0 %v781
  %875 = vmatprep.subr.mxu0 0.0
  %876 = vmatpush1.msra.mxu0 %v780
  %877 = vmatprep.subr.mxu0 0.0
  %878 = vmatpush1.msra.mxu0 %v779
  %879 = vmatprep.subr.mxu0 0.0
  %880 = vmatpush1.msra.mxu0 %v778
  %881 = vmatprep.subr.mxu0 0.0
  %882 = vmatpush1.msra.mxu0 %v777
  %883 = vmatprep.subr.mxu0 0.0
  %884 = vmatpush1.msra.mxu0 %v776
  %885 = vmatprep.subr.mxu0 0.0
  %886 = vmatpush1.msra.mxu0 %v775
  %887 = vmatprep.subr.mxu0 0.0
  %888 = vmatpush1.msra.mxu0 %v774
  %889 = vmatprep.subr.mxu0 0.0
  %890 = vmatpush1.msra.mxu0 %v773
  %891 = vmatprep.subr.mxu0 0.0
  %892 = vmatpush1.msra.mxu0 %v772
  %893 = vmatprep.subr.mxu0 0.0
  %894 = vmatpush1.msra.mxu0 %v771
  %895 = vmatprep.subr.mxu0 0.0
  %896 = vmatpush1.msra.mxu0 %v770
  %897 = vmatprep.subr.mxu0 0.0
  %898 = vmatpush1.msra.mxu0 %v769
  %899 = vmatprep.subr.mxu0 0.0
  %900 = vmatpush1.msra.mxu0 %v768
  %901 = vmatprep.subr.mxu0 0.0
  %902 = vmatpush1.msra.mxu0 %v767
  %903 = vmatprep.subr.mxu0 0.0
  %904 = vmatpush1.msra.mxu0 %v766
  %905 = vmatprep.subr.mxu0 0.0
  %906 = vmatpush2.msra.mxu0 %v797
  %907 = vmatprep.subr.mxu0 0.0
  %908 = vmatpush2.msra.mxu0 %v796
  %909 = vmatprep.subr.mxu0 0.0
  %910 = vmatpush2.msra.mxu0 %v795
  %911 = vmatprep.subr.mxu0 0.0
  %912 = vmatpush2.msra.mxu0 %v794
  %913 = vmatprep.subr.mxu0 0.0
  %914 = vmatpush2.msra.mxu0 %v793
  %915 = vmatprep.subr.mxu0 0.0
  %916 = vmatpush2.msra.mxu0 %v792
  %917 = vmatprep.subr.mxu0 0.0
  %918 = vmatpush2.msra.mxu0 %v791
  %919 = vmatprep.subr.mxu0 0.0
  %920 = vmatpush2.msra.mxu0 %v790
  %921 = vmatprep.subr.mxu0 0.0
  %922 = vmatpush2.msra.mxu0 %v789
  %923 = vmatprep.subr.mxu0 0.0
  %924 = vmatpush2.msra.mxu0 %v788
  %925 = vmatprep.subr.mxu0 0.0
  %926 = vmatpush2.msra.mxu0 %v787
  %927 = vmatprep.subr.mxu0 0.0
  %928 = vmatpush2.msra.mxu0 %v786
  %929 = vmatprep.subr.mxu0 0.0
  %930 = vmatpush2.msra.mxu0 %v785
  %931 = vmatprep.subr.mxu0 0.0
  %932 = vmatpush2.msra.mxu0 %v784
  %933 = vmatprep.subr.mxu0 0.0
  %934 = vmatpush2.msra.mxu0 %v783
  %935 = vmatprep.subr.mxu0 0.0
  %936 = vmatpush2.msra.mxu0 %v782
  %937 = vmatprep.mubr.f32.mxu0 %v721
  %938 = vmatmul.mubr.f32.gmra.mxu0 %v720
  %v939 = vpop.f32.mrf.mxu0
  %v940 = vadd.f32 %v865, %v939
  %v941 = vpop.f32.mrf.mxu0
  %942 = vmatprep.mubr.f32.mxu0 %v725
  %943 = vmatmul.mubr.f32.gmra.mxu0 %v724
  %v944 = vpop.f32.mrf.mxu0
  %v945 = vadd.f32 %v870, %v944
  %v946 = vpop.f32.mrf.mxu0
  %947 = vdwg.mxu0
  %v948 = vtanh.pop %v940
  %v949 = vtanh.pop %v945
  %vm950 = vcmask 7168
  %951 = vst.msk [vmem:[%s14] sm:$0xff] %vm950, %v948
  %vm952 = vcmask 3072
  %953 = vst.msk [vmem:[%s14 + $0x8] sm:$0xf] %vm952, %v949
  // Predicated region
  $region54: #{net_forward.2} parent=0 // pred_check
    _
  $region55: #{net_forward.2} parent=0 // pred_check_branch
    %955 = sbr.rel (0) target = $region57
  $region56: #{net_forward.2} parent=0 // pred_region
    _
  $region57: #{net_forward.2} parent=0 // pred_fallthru
    _
  // Predicated region
  $region58: #{net_forward.2} parent=0 // pred_check
    _
  $region59: #{net_forward.2} parent=0 // pred_check_branch
    %957 = sbr.rel (0) target = $region61
  $region60: #{net_forward.2} parent=0 // pred_region
    _
  $region61: #{net_forward.2} parent=0 // pred_fallthru
    _
  // Predicated region
  $region62: #{net_forward.2} parent=0 // pred_check
    _
  $region63: #{net_forward.2} parent=0 // pred_check_branch
    %959 = sbr.rel (0) target = $region65
  $region64: #{net_forward.2} parent=0 // pred_region
    _
  $region65: #{net_forward.2} parent=0 // pred_fallthru
    _
  // Predicated region
  $region66: #{net_forward.2} parent=0 // pred_check
    _
  $region67: #{net_forward.2} parent=0 // pred_check_branch
    %961 = sbr.rel (0) target = $region69
  $region68: #{net_forward.2} parent=0 // pred_region
    _
  $region69: #{net_forward.2} parent=0 // pred_fallthru
    _

</llo_original>
